<compile_context>
chip_gen: v7x
topology: tpu7x:2x2x1
jax: 0.10.0
libtpu: 0.0.40
codegen_flags: <defaults>
</compile_context>

<pallas_src>
import functools

import jax
import jax.numpy as jnp
from jax.experimental import pallas as pl
from jax.experimental.pallas import tpu as pltpu

LATENT = 10       # real latent width (mu / sigma each)
LAT_PAD = 128     # latent lanes padded to a full vreg lane width
SIGMA_OFF = 64    # lane offset of the sigma columns in the fused head
_SUB = 16         # sublane alignment for batch tiles (bf16 rows pack in pairs)


def _vae_kernel(x_ref, eps_ref,
                w1, b1, w2, b2,            # encoder 784->256->64
                w3, b3,                    # fused mu|sigma head: 64->128
                w4, b4, w5, b5, w6, b6,    # decoder 128(10 real)->64->256->784
                out_ref, kld_ref,
                *, tb, batch):
    f32 = jnp.float32
    bf16 = jnp.bfloat16

    def dense(h, w_ref, b_ref, relu=True):
        # Weights are already bf16 in VMEM; activations cast at the MXU
        # boundary; f32 accumulation; bias / activation stay f32 (VPU).
        y = jnp.dot(h.astype(bf16), w_ref[...],
                    preferred_element_type=f32) + b_ref[...]
        return jnp.maximum(y, 0.0) if relu else y

    x = x_ref[...]                             # [TB, 784] bf16 (pre-cast)

    # ---- encoder ----
    h = dense(x, w1, b1)                       # [TB, 256] f32
    h = dense(h, w2, b2)                       # [TB, 64]
    head = dense(h, w3, b3)                    # [TB, 128]: mu@[0,10), sigma@[64,74)

    # ---- reparameterization:  z[0:10] = mu + sigma * eps ----
    # eps lives in lanes [64,74); head*eps is nonzero only there; rolling by
    # 64 (== LAT_PAD/2) drops sigma*eps onto the mu lanes.  The residual sigma
    # copy left at lanes [64,74) is annihilated by the zero rows of w4.
    z = head + pltpu.roll(head * eps_ref[...], shift=SIGMA_OFF, axis=1)

    # ---- decoder ----
    d = dense(z, w4, b4)                       # [TB, 64]
    d = dense(d, w5, b5)                       # [TB, 256]
    logits = dense(d, w6, b6, relu=False)      # [TB, 784]

    # numerically stable sigmoid; exp + approx reciprocal run on the EUP slot.
    # Clamp: approx reciprocal can exceed the exact 1/(1+e) by ~1e-4.
    e = jnp.exp(-jnp.abs(logits))
    r = pl.reciprocal(1.0 + e, approx=True)
    out_ref[...] = jnp.minimum(jnp.where(logits >= 0.0, r, e * r), 1.0)

    # ---- per-tile KLD partials: reduce over rows only (lane-dense store),
    # mask padded batch rows; mu lanes contribute mu^2, sigma lanes contribute
    # sigma^2 - log(1e-8 + sigma^2) - 1. ----
    lane = jax.lax.broadcasted_iota(jnp.int32, (tb, LAT_PAD), 1)
    row = jax.lax.broadcasted_iota(jnp.int32, (tb, LAT_PAD), 0) + pl.program_id(0) * tb
    row_ok = row < batch
    mu_lane = lane < LATENT
    sg_lane = (lane >= SIGMA_OFF) & (lane < SIGMA_OFF + LATENT)
    h2 = head * head
    term = (jnp.where(row_ok & (mu_lane | sg_lane), h2, 0.0)
            + jnp.where(row_ok & sg_lane, -jnp.log(1e-8 + h2) - 1.0, 0.0))
    kld_ref[...] = jnp.sum(term, axis=0, keepdims=True)


def _round_up(n, m):
    return ((n + m - 1) // m) * m


def _cdiv(a, b):
    return -(-a // b)


def _choose_tiling(batch, tb):
    """Pick (TB, B_pad, num_tiles): minimal padding, sublane-aligned tiles,
    and >= 2 tiles whenever the batch allows it (v7x megacore sharding)."""
    b_al = _round_up(batch, _SUB)
    num_tiles = max(_cdiv(b_al, min(tb, b_al)), 2 if b_al >= 2 * _SUB else 1)
    tile = _round_up(_cdiv(b_al, num_tiles), _SUB)
    num_tiles = _cdiv(b_al, tile)
    return tile, num_tiles * tile, num_tiles


def vae_forward(x_nchw, eps, params, *, tb=512):
    """x_nchw: [B, 1, 28, 28]; eps: [B, 10] (reparameterization noise).

    params: from init_params (weights bf16, biases f32, fused/padded heads).
    tb: max batch tile; adaptively shrunk to avoid padding waste and to give
    >= 2 grid steps on multi-TensorCore chips."""
    B = x_nchw.shape[0]
    x_flat = x_nchw.reshape(B, 784).astype(jnp.bfloat16)   # halve input DMA

    TB, B_pad, num_tiles = _choose_tiling(B, tb)

    if B_pad != B:
        x_flat = jnp.pad(x_flat, ((0, B_pad - B), (0, 0)))
    # eps goes into the sigma lanes [64, 74) so head*eps lands there directly.
    eps_pad = jnp.pad(eps.astype(jnp.float32),
                      ((0, B_pad - B),
                       (SIGMA_OFF, LAT_PAD - SIGMA_OFF - LATENT)))

    row_spec_x = pl.BlockSpec((TB, 784), lambda i: (i, 0))
    row_spec_eps = pl.BlockSpec((TB, LAT_PAD), lambda i: (i, 0))
    # constant index_map -> weights DMA'd once, VMEM resident across the grid
    weight_specs = [pl.BlockSpec(p.shape, lambda i: (0, 0)) for p in params]

    kernel = functools.partial(_vae_kernel, tb=TB, batch=B)

    out_pad, kld_parts = pl.pallas_call(
        kernel,
        grid=(num_tiles,),
        in_specs=[row_spec_x, row_spec_eps] + weight_specs,
        out_specs=(
            pl.BlockSpec((TB, 784), lambda i: (i, 0)),
            # tiny (1, 128) partial per tile; accepted sub-(8,128) store
            pl.BlockSpec((1, LAT_PAD), lambda i: (i, 0)),
        ),
        out_shape=(
            jax.ShapeDtypeStruct((B_pad, 784), jnp.float32),
            jax.ShapeDtypeStruct((num_tiles, LAT_PAD), jnp.float32),
        ),
        compiler_params=pltpu.CompilerParams(
            dimension_semantics=("parallel",),
            vmem_limit_bytes=48 * 1024 * 1024,   # fits v7x 64 MiB/TC ceiling
        ),
    )(x_flat, eps_pad, *params)

    output = out_pad[:B].reshape(B, 1, 28, 28)
    kld = 0.5 * jnp.sum(kld_parts) / B
    return output, kld


def init_params(key):
    """Deterministic synthetic parameters matching nn.Linear init.  Linear
    weights are stored as (in, out) so the kernel computes x @ W + b
    (== PyTorch's x @ W.T + b), pre-cast to bf16 (MXU operand dtype); biases
    stay f32.  The 64->20 head is packed into one [64,128] weight with mu
    columns at lanes [0,10) and sigma columns at [64,74); the decoder's 10->64
    weight is zero-padded to 128 input rows."""
    def linear(k, din, dout):
        kw, kb = jax.random.split(k)
        s = 1.0 / jnp.sqrt(jnp.float32(din))
        w = jax.random.uniform(kw, (din, dout), jnp.float32, -s, s)
        b = jax.random.uniform(kb, (1, dout), jnp.float32, -s, s)
        return w, b

    keys = jax.random.split(key, 6)
    w1, b1 = linear(keys[0], 784, 256)
    w2, b2 = linear(keys[1], 256, 64)
    w3, b3 = linear(keys[2], 64, 2 * LATENT)      # original 64 -> 20 head
    w4, b4 = linear(keys[3], LATENT, 64)          # original 10 -> 64
    w5, b5 = linear(keys[4], 64, 256)
    w6, b6 = linear(keys[5], 256, 784)

    # fused head: mu at lanes [0,10), sigma at lanes [64,74), rest zero
    w3h = jnp.zeros((64, LAT_PAD), jnp.float32)
    w3h = w3h.at[:, :LATENT].set(w3[:, :LATENT])
    w3h = w3h.at[:, SIGMA_OFF:SIGMA_OFF + LATENT].set(w3[:, LATENT:])
    b3h = jnp.zeros((1, LAT_PAD), jnp.float32)
    b3h = b3h.at[:, :LATENT].set(b3[:, :LATENT])
    b3h = b3h.at[:, SIGMA_OFF:SIGMA_OFF + LATENT].set(b3[:, LATENT:])
    w4p = jnp.pad(w4, ((0, LAT_PAD - LATENT), (0, 0)))   # [128, 64], rows>=10 zero

    bf16 = jnp.bfloat16
    return [w1.astype(bf16), b1, w2.astype(bf16), b2,
            w3h.astype(bf16), b3h, w4p.astype(bf16), b4,
            w5.astype(bf16), b5, w6.astype(bf16), b6]


def _reference(x_nchw, eps, params):
    """Pure-JAX reference using the same bf16-matmul / f32-accumulate recipe.
    (bf16 MXU operands vs the f32 PyTorch reference is an accepted ~1e-2
    tolerance for this workload.)"""
    (w1, b1, w2, b2, w3h, b3h, w4p, b4, w5, b5, w6, b6) = params
    bf16 = jnp.bfloat16

    def dense(h, w, b, relu=True):
        y = jnp.dot(h.astype(bf16), w, preferred_element_type=jnp.float32) + b
        return jnp.maximum(y, 0.0) if relu else y

    B = x_nchw.shape[0]
    x = x_nchw.reshape(B, 784).astype(bf16)
    h = dense(x, w1, b1)
    h = dense(h, w2, b2)
    mu = dense(h, w3h[:, :LATENT], b3h[:, :LATENT])
    sg = dense(h, w3h[:, SIGMA_OFF:SIGMA_OFF + LATENT],
               b3h[:, SIGMA_OFF:SIGMA_OFF + LATENT])
    z = mu + sg * eps
    d = dense(z, w4p[:LATENT], b4)
    d = dense(d, w5, b5)
    out = jax.nn.sigmoid(dense(d, w6, b6, relu=False)).reshape(B, 1, 28, 28)
    kld = 0.5 * jnp.sum(mu ** 2 + sg ** 2 - jnp.log(1e-8 + sg ** 2) - 1.0) / B
    return out, kld


if __name__ == "__main__":
    key = jax.random.PRNGKey(0)
    kx, keps, kp = jax.random.split(key, 3)

    B = 8
    x = jax.random.uniform(kx, (B, 1, 28, 28), jnp.float32)   # MNIST-like input
    eps = jax.random.normal(keps, (B, LATENT), jnp.float32)   # torch.randn_like(sigma)
    params = init_params(kp)

    output, kld = jax.jit(vae_forward)(x, eps, params)
    jax.block_until_ready((output, kld))

    assert output.shape == (B, 1, 28, 28) and output.dtype == jnp.float32
    assert kld.shape == () and kld.dtype == jnp.float32
    assert bool(jnp.all((output >= 0.0) & (output <= 1.0)))
    assert bool(jnp.isfinite(kld))

    out_ref, kld_ref = _reference(x, eps, params)
    assert bool(jnp.allclose(output, out_ref, atol=2e-2)), "output mismatch"
    assert bool(jnp.allclose(kld, kld_ref, rtol=5e-3, atol=1e-1)), "kld mismatch"

    print("KERNEL_OK")
</pallas_src>

<mosaic_0001>
module attributes {stable_mosaic.version = 11 : i64} {
  func.func @_vae_kernel(%arg0: i32, %arg1: memref<16x784xbf16, #tpu.memory_space<vmem>>, %arg2: memref<16x128xf32, #tpu.memory_space<vmem>>, %arg3: memref<784x256xbf16, #tpu.memory_space<vmem>>, %arg4: memref<1x256xf32, #tpu.memory_space<vmem>>, %arg5: memref<256x64xbf16, #tpu.memory_space<vmem>>, %arg6: memref<1x64xf32, #tpu.memory_space<vmem>>, %arg7: memref<64x128xbf16, #tpu.memory_space<vmem>>, %arg8: memref<1x128xf32, #tpu.memory_space<vmem>>, %arg9: memref<128x64xbf16, #tpu.memory_space<vmem>>, %arg10: memref<1x64xf32, #tpu.memory_space<vmem>>, %arg11: memref<64x256xbf16, #tpu.memory_space<vmem>>, %arg12: memref<1x256xf32, #tpu.memory_space<vmem>>, %arg13: memref<256x784xbf16, #tpu.memory_space<vmem>>, %arg14: memref<1x784xf32, #tpu.memory_space<vmem>>, %arg15: memref<16x784xf32, #tpu.memory_space<vmem>>, %arg16: memref<1x128xf32, #tpu.memory_space<vmem>>) attributes {dimension_semantics = [#tpu.dimension_semantics<parallel>], iteration_bounds = array<i64: 1>, scalar_prefetch = 0 : i64, scratch_operands = 0 : i64, tpu.core_type = #tpu.core_type<tc>, window_params = [{transform_indices = @transform_0, window_bounds = array<i64: 16, 784>}, {transform_indices = @transform_1, window_bounds = array<i64: 16, 128>}, {pipeline_mode = #tpu.pipeline_mode<synchronous>, transform_indices = @transform_2, window_bounds = array<i64: 784, 256>}, {pipeline_mode = #tpu.pipeline_mode<synchronous>, transform_indices = @transform_3, window_bounds = array<i64: 1, 256>}, {pipeline_mode = #tpu.pipeline_mode<synchronous>, transform_indices = @transform_4, window_bounds = array<i64: 256, 64>}, {pipeline_mode = #tpu.pipeline_mode<synchronous>, transform_indices = @transform_5, window_bounds = array<i64: 1, 64>}, {pipeline_mode = #tpu.pipeline_mode<synchronous>, transform_indices = @transform_6, window_bounds = array<i64: 64, 128>}, {pipeline_mode = #tpu.pipeline_mode<synchronous>, transform_indices = @transform_7, window_bounds = array<i64: 1, 128>}, {pipeline_mode = #tpu.pipeline_mode<synchronous>, transform_indices = @transform_8, window_bounds = array<i64: 128, 64>}, {pipeline_mode = #tpu.pipeline_mode<synchronous>, transform_indices = @transform_9, window_bounds = array<i64: 1, 64>}, {pipeline_mode = #tpu.pipeline_mode<synchronous>, transform_indices = @transform_10, window_bounds = array<i64: 64, 256>}, {pipeline_mode = #tpu.pipeline_mode<synchronous>, transform_indices = @transform_11, window_bounds = array<i64: 1, 256>}, {pipeline_mode = #tpu.pipeline_mode<synchronous>, transform_indices = @transform_12, window_bounds = array<i64: 256, 784>}, {pipeline_mode = #tpu.pipeline_mode<synchronous>, transform_indices = @transform_13, window_bounds = array<i64: 1, 784>}, {transform_indices = @transform_14, window_bounds = array<i64: 16, 784>}, {transform_indices = @transform_15, window_bounds = array<i64: 1, 128>}]} {
    %c0 = arith.constant 0 : index
    %c0_0 = arith.constant 0 : index
    %0 = vector.load %arg1[%c0, %c0_0] : memref<16x784xbf16, #tpu.memory_space<vmem>>, vector<16x784xbf16>
    %c0_1 = arith.constant 0 : index
    %c0_2 = arith.constant 0 : index
    %1 = vector.load %arg3[%c0_1, %c0_2] : memref<784x256xbf16, #tpu.memory_space<vmem>>, vector<784x256xbf16>
    %cst = arith.constant dense<0.000000e+00> : vector<16x256xf32>
    %2 = tpu.matmul %0, %1, %cst {dimension_numbers = #tpu.dot_dimension_numbers<[1], [0], [0], [1], [0, 0, 1, 1], [], []>} : vector<16x784xbf16>, vector<784x256xbf16>, vector<16x256xf32> -> vector<16x256xf32>
    %c0_3 = arith.constant 0 : index
    %c0_4 = arith.constant 0 : index
    %3 = vector.load %arg4[%c0_3, %c0_4] : memref<1x256xf32, #tpu.memory_space<vmem>>, vector<1x256xf32>
    %4 = vector.broadcast %3 : vector<1x256xf32> to vector<16x256xf32>
    %5 = arith.addf %2, %4 : vector<16x256xf32>
    %cst_5 = arith.constant 0.000000e+00 : f32
    %6 = vector.broadcast %cst_5 : f32 to vector<16x256xf32>
    %7 = arith.maximumf %5, %6 : vector<16x256xf32>
    %8 = arith.truncf %7 : vector<16x256xf32> to vector<16x256xbf16>
    %c0_6 = arith.constant 0 : index
    %c0_7 = arith.constant 0 : index
    %9 = vector.load %arg5[%c0_6, %c0_7] : memref<256x64xbf16, #tpu.memory_space<vmem>>, vector<256x64xbf16>
    %cst_8 = arith.constant dense<0.000000e+00> : vector<16x64xf32>
    %10 = tpu.matmul %8, %9, %cst_8 {dimension_numbers = #tpu.dot_dimension_numbers<[1], [0], [0], [1], [0, 0, 1, 1], [], []>} : vector<16x256xbf16>, vector<256x64xbf16>, vector<16x64xf32> -> vector<16x64xf32>
    %c0_9 = arith.constant 0 : index
    %c0_10 = arith.constant 0 : index
    %11 = vector.load %arg6[%c0_9, %c0_10] : memref<1x64xf32, #tpu.memory_space<vmem>>, vector<1x64xf32>
    %12 = vector.broadcast %11 : vector<1x64xf32> to vector<16x64xf32>
    %13 = arith.addf %10, %12 : vector<16x64xf32>
    %cst_11 = arith.constant 0.000000e+00 : f32
    %14 = vector.broadcast %cst_11 : f32 to vector<16x64xf32>
    %15 = arith.maximumf %13, %14 : vector<16x64xf32>
    %16 = arith.truncf %15 : vector<16x64xf32> to vector<16x64xbf16>
    %c0_12 = arith.constant 0 : index
    %c0_13 = arith.constant 0 : index
    %17 = vector.load %arg7[%c0_12, %c0_13] : memref<64x128xbf16, #tpu.memory_space<vmem>>, vector<64x128xbf16>
    %cst_14 = arith.constant dense<0.000000e+00> : vector<16x128xf32>
    %18 = tpu.matmul %16, %17, %cst_14 {dimension_numbers = #tpu.dot_dimension_numbers<[1], [0], [0], [1], [0, 0, 1, 1], [], []>} : vector<16x64xbf16>, vector<64x128xbf16>, vector<16x128xf32> -> vector<16x128xf32>
    %c0_15 = arith.constant 0 : index
    %c0_16 = arith.constant 0 : index
    %19 = vector.load %arg8[%c0_15, %c0_16] : memref<1x128xf32, #tpu.memory_space<vmem>>, vector<1x128xf32>
    %20 = vector.broadcast %19 : vector<1x128xf32> to vector<16x128xf32>
    %21 = arith.addf %18, %20 : vector<16x128xf32>
    %cst_17 = arith.constant 0.000000e+00 : f32
    %22 = vector.broadcast %cst_17 : f32 to vector<16x128xf32>
    %23 = arith.maximumf %21, %22 : vector<16x128xf32>
    %c0_18 = arith.constant 0 : index
    %c0_19 = arith.constant 0 : index
    %24 = vector.load %arg2[%c0_18, %c0_19] : memref<16x128xf32, #tpu.memory_space<vmem>>, vector<16x128xf32>
    %25 = arith.mulf %23, %24 : vector<16x128xf32>
    %c64_i32 = arith.constant 64 : i32
    %26 = tpu.dynamic_rotate %25 by %c64_i32 dim 1 : vector<16x128xf32>, i32 -> vector<16x128xf32>
    %27 = arith.addf %23, %26 : vector<16x128xf32>
    %28 = arith.truncf %27 : vector<16x128xf32> to vector<16x128xbf16>
    %c0_20 = arith.constant 0 : index
    %c0_21 = arith.constant 0 : index
    %29 = vector.load %arg9[%c0_20, %c0_21] : memref<128x64xbf16, #tpu.memory_space<vmem>>, vector<128x64xbf16>
    %cst_22 = arith.constant dense<0.000000e+00> : vector<16x64xf32>
    %30 = tpu.matmul %28, %29, %cst_22 {dimension_numbers = #tpu.dot_dimension_numbers<[1], [0], [0], [1], [0, 0, 1, 1], [], []>} : vector<16x128xbf16>, vector<128x64xbf16>, vector<16x64xf32> -> vector<16x64xf32>
    %c0_23 = arith.constant 0 : index
    %c0_24 = arith.constant 0 : index
    %31 = vector.load %arg10[%c0_23, %c0_24] : memref<1x64xf32, #tpu.memory_space<vmem>>, vector<1x64xf32>
    %32 = vector.broadcast %31 : vector<1x64xf32> to vector<16x64xf32>
    %33 = arith.addf %30, %32 : vector<16x64xf32>
    %cst_25 = arith.constant 0.000000e+00 : f32
    %34 = vector.broadcast %cst_25 : f32 to vector<16x64xf32>
    %35 = arith.maximumf %33, %34 : vector<16x64xf32>
    %36 = arith.truncf %35 : vector<16x64xf32> to vector<16x64xbf16>
    %c0_26 = arith.constant 0 : index
    %c0_27 = arith.constant 0 : index
    %37 = vector.load %arg11[%c0_26, %c0_27] : memref<64x256xbf16, #tpu.memory_space<vmem>>, vector<64x256xbf16>
    %cst_28 = arith.constant dense<0.000000e+00> : vector<16x256xf32>
    %38 = tpu.matmul %36, %37, %cst_28 {dimension_numbers = #tpu.dot_dimension_numbers<[1], [0], [0], [1], [0, 0, 1, 1], [], []>} : vector<16x64xbf16>, vector<64x256xbf16>, vector<16x256xf32> -> vector<16x256xf32>
    %c0_29 = arith.constant 0 : index
    %c0_30 = arith.constant 0 : index
    %39 = vector.load %arg12[%c0_29, %c0_30] : memref<1x256xf32, #tpu.memory_space<vmem>>, vector<1x256xf32>
    %40 = vector.broadcast %39 : vector<1x256xf32> to vector<16x256xf32>
    %41 = arith.addf %38, %40 : vector<16x256xf32>
    %cst_31 = arith.constant 0.000000e+00 : f32
    %42 = vector.broadcast %cst_31 : f32 to vector<16x256xf32>
    %43 = arith.maximumf %41, %42 : vector<16x256xf32>
    %44 = arith.truncf %43 : vector<16x256xf32> to vector<16x256xbf16>
    %c0_32 = arith.constant 0 : index
    %c0_33 = arith.constant 0 : index
    %45 = vector.load %arg13[%c0_32, %c0_33] : memref<256x784xbf16, #tpu.memory_space<vmem>>, vector<256x784xbf16>
    %cst_34 = arith.constant dense<0.000000e+00> : vector<16x784xf32>
    %46 = tpu.matmul %44, %45, %cst_34 {dimension_numbers = #tpu.dot_dimension_numbers<[1], [0], [0], [1], [0, 0, 1, 1], [], []>} : vector<16x256xbf16>, vector<256x784xbf16>, vector<16x784xf32> -> vector<16x784xf32>
    %c0_35 = arith.constant 0 : index
    %c0_36 = arith.constant 0 : index
    %47 = vector.load %arg14[%c0_35, %c0_36] : memref<1x784xf32, #tpu.memory_space<vmem>>, vector<1x784xf32>
    %48 = vector.broadcast %47 : vector<1x784xf32> to vector<16x784xf32>
    %49 = arith.addf %46, %48 : vector<16x784xf32>
    %50 = math.absf %49 : vector<16x784xf32>
    %cst_37 = arith.constant 0.000000e+00 : f32
    %51 = vector.broadcast %cst_37 : f32 to vector<16x784xf32>
    %52 = arith.subf %51, %50 : vector<16x784xf32>
    %53 = math.exp %52 : vector<16x784xf32>
    %cst_38 = arith.constant 1.000000e+00 : f32
    %54 = vector.broadcast %cst_38 : f32 to vector<16x784xf32>
    %55 = arith.addf %54, %53 : vector<16x784xf32>
    %56 = tpu.reciprocal %55 {approx = true} : vector<16x784xf32> -> vector<16x784xf32>
    %cst_39 = arith.constant 0.000000e+00 : f32
    %57 = vector.broadcast %cst_39 : f32 to vector<16x784xf32>
    %58 = arith.cmpf oge, %49, %57 : vector<16x784xf32>
    %59 = arith.mulf %53, %56 : vector<16x784xf32>
    %60 = arith.select %58, %56, %59 : vector<16x784xi1>, vector<16x784xf32>
    %cst_40 = arith.constant 1.000000e+00 : f32
    %61 = vector.broadcast %cst_40 : f32 to vector<16x784xf32>
    %62 = arith.minimumf %60, %61 : vector<16x784xf32>
    %c0_41 = arith.constant 0 : index
    %c0_42 = arith.constant 0 : index
    %63 = vector.load %arg15[%c0_41, %c0_42] : memref<16x784xf32, #tpu.memory_space<vmem>>, vector<16x784xf32>
    tpu.vector_store %arg15[%c0_41, %c0_42], %62 {strides = array<i32>} : memref<16x784xf32, #tpu.memory_space<vmem>>, vector<16x784xf32>,
    %64 = tpu.iota {dimensions = array<i32: 1>} : vector<16x128xi32>
    %65 = tpu.iota {dimensions = array<i32: 0>} : vector<16x128xi32>
    %c16_i32 = arith.constant 16 : i32
    %66 = arith.muli %arg0, %c16_i32 : i32
    %67 = vector.broadcast %66 : i32 to vector<16x128xi32>
    %68 = arith.addi %65, %67 : vector<16x128xi32>
    %c8_i32 = arith.constant 8 : i32
    %69 = vector.broadcast %c8_i32 : i32 to vector<16x128xi32>
    %70 = arith.cmpi slt, %68, %69 : vector<16x128xi32>
    %c10_i32 = arith.constant 10 : i32
    %71 = vector.broadcast %c10_i32 : i32 to vector<16x128xi32>
    %72 = arith.cmpi slt, %64, %71 : vector<16x128xi32>
    %c64_i32_43 = arith.constant 64 : i32
    %73 = vector.broadcast %c64_i32_43 : i32 to vector<16x128xi32>
    %74 = arith.cmpi sge, %64, %73 : vector<16x128xi32>
    %c74_i32 = arith.constant 74 : i32
    %75 = vector.broadcast %c74_i32 : i32 to vector<16x128xi32>
    %76 = arith.cmpi slt, %64, %75 : vector<16x128xi32>
    %77 = arith.andi %74, %76 : vector<16x128xi1>
    %78 = arith.mulf %23, %23 : vector<16x128xf32>
    %79 = arith.ori %72, %77 : vector<16x128xi1>
    %80 = arith.andi %70, %79 : vector<16x128xi1>
    %cst_44 = arith.constant 0.000000e+00 : f32
    %81 = vector.broadcast %cst_44 : f32 to vector<16x128xf32>
    %82 = arith.select %80, %78, %81 : vector<16x128xi1>, vector<16x128xf32>
    %83 = arith.andi %70, %77 : vector<16x128xi1>
    %cst_45 = arith.constant 9.99999993E-9 : f32
    %84 = vector.broadcast %cst_45 : f32 to vector<16x128xf32>
    %85 = arith.addf %84, %78 : vector<16x128xf32>
    %86 = math.log %85 : vector<16x128xf32>
    %cst_46 = arith.constant 0.000000e+00 : f32
    %87 = vector.broadcast %cst_46 : f32 to vector<16x128xf32>
    %88 = arith.subf %87, %86 : vector<16x128xf32>
    %cst_47 = arith.constant 1.000000e+00 : f32
    %89 = vector.broadcast %cst_47 : f32 to vector<16x128xf32>
    %90 = arith.subf %88, %89 : vector<16x128xf32>
    %cst_48 = arith.constant 0.000000e+00 : f32
    %91 = vector.broadcast %cst_48 : f32 to vector<16x128xf32>
    %92 = arith.select %83, %90, %91 : vector<16x128xi1>, vector<16x128xf32>
    %93 = arith.addf %82, %92 : vector<16x128xf32>
    %cst_49 = arith.constant dense<0.000000e+00> : vector<128xf32>
    %94 = vector.multi_reduction <add>, %93, %cst_49 [0] : vector<16x128xf32> to vector<128xf32>
    %95 = vector.shape_cast %94 : vector<128xf32> to vector<1x128xf32>
    %c0_50 = arith.constant 0 : index
    %c0_51 = arith.constant 0 : index
    %96 = vector.load %arg16[%c0_50, %c0_51] : memref<1x128xf32, #tpu.memory_space<vmem>>, vector<1x128xf32>
    tpu.vector_store %arg16[%c0_50, %c0_51], %95 {strides = array<i32>} : memref<1x128xf32, #tpu.memory_space<vmem>>, vector<1x128xf32>,
    return
  }
  func.func @transform_0(%arg0: i32) -> (i32, i32) {
    %c0_i32 = arith.constant 0 : i32
    %c0_i32_0 = arith.constant 0 : i32
    return %arg0, %c0_i32 : i32, i32
  }
  func.func @transform_1(%arg0: i32) -> (i32, i32) {
    %c0_i32 = arith.constant 0 : i32
    %c0_i32_0 = arith.constant 0 : i32
    return %arg0, %c0_i32 : i32, i32
  }
  func.func @transform_2(%arg0: i32) -> (i32, i32) {
    %c0_i32 = arith.constant 0 : i32
    %c0_i32_0 = arith.constant 0 : i32
    %c0_i32_1 = arith.constant 0 : i32
    return %c0_i32, %c0_i32_0 : i32, i32
  }
  func.func @transform_3(%arg0: i32) -> (i32, i32) {
    %c0_i32 = arith.constant 0 : i32
    %c0_i32_0 = arith.constant 0 : i32
    %c0_i32_1 = arith.constant 0 : i32
    return %c0_i32, %c0_i32_0 : i32, i32
  }
  func.func @transform_4(%arg0: i32) -> (i32, i32) {
    %c0_i32 = arith.constant 0 : i32
    %c0_i32_0 = arith.constant 0 : i32
    %c0_i32_1 = arith.constant 0 : i32
    return %c0_i32, %c0_i32_0 : i32, i32
  }
  func.func @transform_5(%arg0: i32) -> (i32, i32) {
    %c0_i32 = arith.constant 0 : i32
    %c0_i32_0 = arith.constant 0 : i32
    %c0_i32_1 = arith.constant 0 : i32
    return %c0_i32, %c0_i32_0 : i32, i32
  }
  func.func @transform_6(%arg0: i32) -> (i32, i32) {
    %c0_i32 = arith.constant 0 : i32
    %c0_i32_0 = arith.constant 0 : i32
    %c0_i32_1 = arith.constant 0 : i32
    return %c0_i32, %c0_i32_0 : i32, i32
  }
  func.func @transform_7(%arg0: i32) -> (i32, i32) {
    %c0_i32 = arith.constant 0 : i32
    %c0_i32_0 = arith.constant 0 : i32
    %c0_i32_1 = arith.constant 0 : i32
    return %c0_i32, %c0_i32_0 : i32, i32
  }
  func.func @transform_8(%arg0: i32) -> (i32, i32) {
    %c0_i32 = arith.constant 0 : i32
    %c0_i32_0 = arith.constant 0 : i32
    %c0_i32_1 = arith.constant 0 : i32
    return %c0_i32, %c0_i32_0 : i32, i32
  }
  func.func @transform_9(%arg0: i32) -> (i32, i32) {
    %c0_i32 = arith.constant 0 : i32
    %c0_i32_0 = arith.constant 0 : i32
    %c0_i32_1 = arith.constant 0 : i32
    return %c0_i32, %c0_i32_0 : i32, i32
  }
  func.func @transform_10(%arg0: i32) -> (i32, i32) {
    %c0_i32 = arith.constant 0 : i32
    %c0_i32_0 = arith.constant 0 : i32
    %c0_i32_1 = arith.constant 0 : i32
    return %c0_i32, %c0_i32_0 : i32, i32
  }
  func.func @transform_11(%arg0: i32) -> (i32, i32) {
    %c0_i32 = arith.constant 0 : i32
    %c0_i32_0 = arith.constant 0 : i32
    %c0_i32_1 = arith.constant 0 : i32
    return %c0_i32, %c0_i32_0 : i32, i32
  }
  func.func @transform_12(%arg0: i32) -> (i32, i32) {
    %c0_i32 = arith.constant 0 : i32
    %c0_i32_0 = arith.constant 0 : i32
    %c0_i32_1 = arith.constant 0 : i32
    return %c0_i32, %c0_i32_0 : i32, i32
  }
  func.func @transform_13(%arg0: i32) -> (i32, i32) {
    %c0_i32 = arith.constant 0 : i32
    %c0_i32_0 = arith.constant 0 : i32
    %c0_i32_1 = arith.constant 0 : i32
    return %c0_i32, %c0_i32_0 : i32, i32
  }
  func.func @transform_14(%arg0: i32) -> (i32, i32) {
    %c0_i32 = arith.constant 0 : i32
    %c0_i32_0 = arith.constant 0 : i32
    return %arg0, %c0_i32 : i32, i32
  }
  func.func @transform_15(%arg0: i32) -> (i32, i32) {
    %c0_i32 = arith.constant 0 : i32
    %c0_i32_0 = arith.constant 0 : i32
    return %arg0, %c0_i32 : i32, i32
  }
}

</mosaic_0001>

<llo_original>
// kernel: vae_forward.1
$region0: #{vae_forward.1}
  #allocation0 [shape = 'u32[]', space=smem, size = 0x4, offset = 0x4, fixed_abs, tag = 'smem constant byte address 0x4 - core index']
  #allocation1 [shape = 'u32[144,128]{1,0:T(1,128)}', space=vmem, size = 0x12000, scoped, tag = 'internal scratch']
  %s0 = inlined_call_operand.vmem [shape: bf16[16,784], index: 0, kind: input, shape index: {}]
  %s1 = inlined_call_operand.vmem [shape: f32[16,128], index: 1, kind: input, shape index: {}]
  %s2 = inlined_call_operand.vmem [shape: bf16[784,256], index: 2, kind: input, shape index: {}]
  %s3 = inlined_call_operand.vmem [shape: f32[1,256], index: 3, kind: input, shape index: {}]
  %s4 = inlined_call_operand.vmem [shape: bf16[256,64], index: 4, kind: input, shape index: {}]
  %s5 = inlined_call_operand.vmem [shape: f32[1,64], index: 5, kind: input, shape index: {}]
  %s6 = inlined_call_operand.vmem [shape: bf16[64,128], index: 6, kind: input, shape index: {}]
  %s7 = inlined_call_operand.vmem [shape: f32[1,128], index: 7, kind: input, shape index: {}]
  %s8 = inlined_call_operand.vmem [shape: bf16[128,64], index: 8, kind: input, shape index: {}]
  %s9 = inlined_call_operand.vmem [shape: f32[1,64], index: 9, kind: input, shape index: {}]
  %s10 = inlined_call_operand.vmem [shape: bf16[64,256], index: 10, kind: input, shape index: {}]
  %s11 = inlined_call_operand.vmem [shape: f32[1,256], index: 11, kind: input, shape index: {}]
  %s12 = inlined_call_operand.vmem [shape: bf16[256,784], index: 12, kind: input, shape index: {}]
  %s13 = inlined_call_operand.vmem [shape: f32[1,784], index: 13, kind: input, shape index: {}]
  %s14 = inlined_call_operand.vmem [shape: f32[16,784], index: 14, kind: output, shape index: {0}]
  %s15 = inlined_call_operand.vmem [shape: f32[1,128], index: 15, kind: output, shape index: {1}]
  %16 = xla_tuple %s14, %s15
  %s17 = sld [smem:[#allocation0]]
  $region74: #{vae_forward.1} parent=0
    _
  %s19 = ssub.s32 1, %s17
  %s20 = scalar_select 0, %s19, %s17
  // Predicated region
  $region2: #{vae_forward.1} parent=0 // pred_check
    _
  $region3: #{vae_forward.1} parent=0 // pred_check_branch
    %22 = sbr.rel (0) target = $region5
  $region4: #{vae_forward.1} parent=0 // pred_region
    _
  $region5: #{vae_forward.1} parent=0 // pred_fallthru
    _
  // Predicated region
  $region6: #{vae_forward.1} parent=0 // pred_check
    _
  $region7: #{vae_forward.1} parent=0 // pred_check_branch
    %24 = sbr.rel (0) target = $region9
  $region8: #{vae_forward.1} parent=0 // pred_region
    _
  $region9: #{vae_forward.1} parent=0 // pred_fallthru
    _
  // Predicated region
  $region10: #{vae_forward.1} parent=0 // pred_check
    _
  $region11: #{vae_forward.1} parent=0 // pred_check_branch
    %26 = sbr.rel (0) target = $region13
  $region12: #{vae_forward.1} parent=0 // pred_region
    _
  $region13: #{vae_forward.1} parent=0 // pred_fallthru
    _
  // Predicated region
  $region14: #{vae_forward.1} parent=0 // pred_check
    _
  $region15: #{vae_forward.1} parent=0 // pred_check_branch
    %28 = sbr.rel (0) target = $region17
  $region16: #{vae_forward.1} parent=0 // pred_region
    _
  $region17: #{vae_forward.1} parent=0 // pred_fallthru
    _
  // Predicated region
  $region18: #{vae_forward.1} parent=0 // pred_check
    _
  $region19: #{vae_forward.1} parent=0 // pred_check_branch
    %30 = sbr.rel (0) target = $region21
  $region20: #{vae_forward.1} parent=0 // pred_region
    _
  $region21: #{vae_forward.1} parent=0 // pred_fallthru
    _
  // Predicated region
  $region22: #{vae_forward.1} parent=0 // pred_check
    _
  $region23: #{vae_forward.1} parent=0 // pred_check_branch
    %32 = sbr.rel (0) target = $region25
  $region24: #{vae_forward.1} parent=0 // pred_region
    _
  $region25: #{vae_forward.1} parent=0 // pred_fallthru
    _
  // Predicated region
  $region26: #{vae_forward.1} parent=0 // pred_check
    _
  $region27: #{vae_forward.1} parent=0 // pred_check_branch
    %34 = sbr.rel (0) target = $region29
  $region28: #{vae_forward.1} parent=0 // pred_region
    _
  $region29: #{vae_forward.1} parent=0 // pred_fallthru
    _
  // Predicated region
  $region30: #{vae_forward.1} parent=0 // pred_check
    _
  $region31: #{vae_forward.1} parent=0 // pred_check_branch
    %36 = sbr.rel (0) target = $region33
  $region32: #{vae_forward.1} parent=0 // pred_region
    _
  $region33: #{vae_forward.1} parent=0 // pred_fallthru
    _
  // Predicated region
  $region34: #{vae_forward.1} parent=0 // pred_check
    _
  $region35: #{vae_forward.1} parent=0 // pred_check_branch
    %38 = sbr.rel (0) target = $region37
  $region36: #{vae_forward.1} parent=0 // pred_region
    _
  $region37: #{vae_forward.1} parent=0 // pred_fallthru
    _
  // Predicated region
  $region38: #{vae_forward.1} parent=0 // pred_check
    _
  $region39: #{vae_forward.1} parent=0 // pred_check_branch
    %40 = sbr.rel (0) target = $region41
  $region40: #{vae_forward.1} parent=0 // pred_region
    _
  $region41: #{vae_forward.1} parent=0 // pred_fallthru
    _
  // Predicated region
  $region42: #{vae_forward.1} parent=0 // pred_check
    _
  $region43: #{vae_forward.1} parent=0 // pred_check_branch
    %42 = sbr.rel (0) target = $region45
  $region44: #{vae_forward.1} parent=0 // pred_region
    _
  $region45: #{vae_forward.1} parent=0 // pred_fallthru
    _
  // Predicated region
  $region46: #{vae_forward.1} parent=0 // pred_check
    _
  $region47: #{vae_forward.1} parent=0 // pred_check_branch
    %44 = sbr.rel (0) target = $region49
  $region48: #{vae_forward.1} parent=0 // pred_region
    _
  $region49: #{vae_forward.1} parent=0 // pred_fallthru
    _
  // Predicated region
  $region50: #{vae_forward.1} parent=0 // pred_check
    _
  $region51: #{vae_forward.1} parent=0 // pred_check_branch
    %46 = sbr.rel (0) target = $region53
  $region52: #{vae_forward.1} parent=0 // pred_region
    _
  $region53: #{vae_forward.1} parent=0 // pred_fallthru
    _
  // Predicated region
  $region54: #{vae_forward.1} parent=0 // pred_check
    _
  $region55: #{vae_forward.1} parent=0 // pred_check_branch
    %48 = sbr.rel (0) target = $region57
  $region56: #{vae_forward.1} parent=0 // pred_region
    _
  $region57: #{vae_forward.1} parent=0 // pred_fallthru
    _
  %v50 = vld [vmem:[%s0] sm:$0xff]
  %v51 = vld [vmem:[%s0 + $0x8] sm:$0xff]
  %v52 = vld [vmem:[%s0 + $0x10] sm:$0xff]
  %v53 = vld [vmem:[%s0 + $0x18] sm:$0xf]
  %v54 = vld [vmem:[%s0 + $0x1c] sm:$0xff]
  %v55 = vld [vmem:[%s0 + $0x24] sm:$0xff]
  %v56 = vld [vmem:[%s0 + $0x2c] sm:$0xff]
  %v57 = vld [vmem:[%s0 + $0x34] sm:$0xf]
  %v58 = vld [vmem:[%s2] sm:$0xff]
  %v59 = vld [vmem:[%s2 + $0x8] sm:$0xff]
  %v60 = vld [vmem:[%s2 + $0x10] sm:$0xff]
  %v61 = vld [vmem:[%s2 + $0x18] sm:$0xff]
  %v62 = vld [vmem:[%s2 + $0x20] sm:$0xff]
  %v63 = vld [vmem:[%s2 + $0x28] sm:$0xff]
  %v64 = vld [vmem:[%s2 + $0x30] sm:$0xff]
  %v65 = vld [vmem:[%s2 + $0x38] sm:$0xff]
  %v66 = vld [vmem:[%s2 + $0x40] sm:$0xff]
  %v67 = vld [vmem:[%s2 + $0x48] sm:$0xff]
  %v68 = vld [vmem:[%s2 + $0x50] sm:$0xff]
  %v69 = vld [vmem:[%s2 + $0x58] sm:$0xff]
  %v70 = vld [vmem:[%s2 + $0x60] sm:$0xff]
  %v71 = vld [vmem:[%s2 + $0x68] sm:$0xff]
  %v72 = vld [vmem:[%s2 + $0x70] sm:$0xff]
  %v73 = vld [vmem:[%s2 + $0x78] sm:$0xff]
  %v74 = vld [vmem:[%s2 + $0x80] sm:$0xff]
  %v75 = vld [vmem:[%s2 + $0x88] sm:$0xff]
  %v76 = vld [vmem:[%s2 + $0x90] sm:$0xff]
  %v77 = vld [vmem:[%s2 + $0x98] sm:$0xff]
  %v78 = vld [vmem:[%s2 + $0xa0] sm:$0xff]
  %v79 = vld [vmem:[%s2 + $0xa8] sm:$0xff]
  %v80 = vld [vmem:[%s2 + $0xb0] sm:$0xff]
  %v81 = vld [vmem:[%s2 + $0xb8] sm:$0xff]
  %v82 = vld [vmem:[%s2 + $0xc0] sm:$0xff]
  %v83 = vld [vmem:[%s2 + $0xc8] sm:$0xff]
  %v84 = vld [vmem:[%s2 + $0xd0] sm:$0xff]
  %v85 = vld [vmem:[%s2 + $0xd8] sm:$0xff]
  %v86 = vld [vmem:[%s2 + $0xe0] sm:$0xff]
  %v87 = vld [vmem:[%s2 + $0xe8] sm:$0xff]
  %v88 = vld [vmem:[%s2 + $0xf0] sm:$0xff]
  %v89 = vld [vmem:[%s2 + $0xf8] sm:$0xff]
  %v90 = vld [vmem:[%s2 + $0x100] sm:$0xff]
  %v91 = vld [vmem:[%s2 + $0x108] sm:$0xff]
  %v92 = vld [vmem:[%s2 + $0x110] sm:$0xff]
  %v93 = vld [vmem:[%s2 + $0x118] sm:$0xff]
  %v94 = vld [vmem:[%s2 + $0x120] sm:$0xff]
  %v95 = vld [vmem:[%s2 + $0x128] sm:$0xff]
  %v96 = vld [vmem:[%s2 + $0x130] sm:$0xff]
  %v97 = vld [vmem:[%s2 + $0x138] sm:$0xff]
  %v98 = vld [vmem:[%s2 + $0x140] sm:$0xff]
  %v99 = vld [vmem:[%s2 + $0x148] sm:$0xff]
  %v100 = vld [vmem:[%s2 + $0x150] sm:$0xff]
  %v101 = vld [vmem:[%s2 + $0x158] sm:$0xff]
  %v102 = vld [vmem:[%s2 + $0x160] sm:$0xff]
  %v103 = vld [vmem:[%s2 + $0x168] sm:$0xff]
  %v104 = vld [vmem:[%s2 + $0x170] sm:$0xff]
  %v105 = vld [vmem:[%s2 + $0x178] sm:$0xff]
  %v106 = vld [vmem:[%s2 + $0x180] sm:$0xff]
  %v107 = vld [vmem:[%s2 + $0x188] sm:$0xff]
  %v108 = vld [vmem:[%s2 + $0x190] sm:$0xff]
  %v109 = vld [vmem:[%s2 + $0x198] sm:$0xff]
  %v110 = vld [vmem:[%s2 + $0x1a0] sm:$0xff]
  %v111 = vld [vmem:[%s2 + $0x1a8] sm:$0xff]
  %v112 = vld [vmem:[%s2 + $0x1b0] sm:$0xff]
  %v113 = vld [vmem:[%s2 + $0x1b8] sm:$0xff]
  %v114 = vld [vmem:[%s2 + $0x1c0] sm:$0xff]
  %v115 = vld [vmem:[%s2 + $0x1c8] sm:$0xff]
  %v116 = vld [vmem:[%s2 + $0x1d0] sm:$0xff]
  %v117 = vld [vmem:[%s2 + $0x1d8] sm:$0xff]
  %v118 = vld [vmem:[%s2 + $0x1e0] sm:$0xff]
  %v119 = vld [vmem:[%s2 + $0x1e8] sm:$0xff]
  %v120 = vld [vmem:[%s2 + $0x1f0] sm:$0xff]
  %v121 = vld [vmem:[%s2 + $0x1f8] sm:$0xff]
  %v122 = vld [vmem:[%s2 + $0x200] sm:$0xff]
  %v123 = vld [vmem:[%s2 + $0x208] sm:$0xff]
  %v124 = vld [vmem:[%s2 + $0x210] sm:$0xff]
  %v125 = vld [vmem:[%s2 + $0x218] sm:$0xff]
  %v126 = vld [vmem:[%s2 + $0x220] sm:$0xff]
  %v127 = vld [vmem:[%s2 + $0x228] sm:$0xff]
  %v128 = vld [vmem:[%s2 + $0x230] sm:$0xff]
  %v129 = vld [vmem:[%s2 + $0x238] sm:$0xff]
  %v130 = vld [vmem:[%s2 + $0x240] sm:$0xff]
  %v131 = vld [vmem:[%s2 + $0x248] sm:$0xff]
  %v132 = vld [vmem:[%s2 + $0x250] sm:$0xff]
  %v133 = vld [vmem:[%s2 + $0x258] sm:$0xff]
  %v134 = vld [vmem:[%s2 + $0x260] sm:$0xff]
  %v135 = vld [vmem:[%s2 + $0x268] sm:$0xff]
  %v136 = vld [vmem:[%s2 + $0x270] sm:$0xff]
  %v137 = vld [vmem:[%s2 + $0x278] sm:$0xff]
  %v138 = vld [vmem:[%s2 + $0x280] sm:$0xff]
  %v139 = vld [vmem:[%s2 + $0x288] sm:$0xff]
  %v140 = vld [vmem:[%s2 + $0x290] sm:$0xff]
  %v141 = vld [vmem:[%s2 + $0x298] sm:$0xff]
  %v142 = vld [vmem:[%s2 + $0x2a0] sm:$0xff]
  %v143 = vld [vmem:[%s2 + $0x2a8] sm:$0xff]
  %v144 = vld [vmem:[%s2 + $0x2b0] sm:$0xff]
  %v145 = vld [vmem:[%s2 + $0x2b8] sm:$0xff]
  %v146 = vld [vmem:[%s2 + $0x2c0] sm:$0xff]
  %v147 = vld [vmem:[%s2 + $0x2c8] sm:$0xff]
  %v148 = vld [vmem:[%s2 + $0x2d0] sm:$0xff]
  %v149 = vld [vmem:[%s2 + $0x2d8] sm:$0xff]
  %v150 = vld [vmem:[%s2 + $0x2e0] sm:$0xff]
  %v151 = vld [vmem:[%s2 + $0x2e8] sm:$0xff]
  %v152 = vld [vmem:[%s2 + $0x2f0] sm:$0xff]
  %v153 = vld [vmem:[%s2 + $0x2f8] sm:$0xff]
  %v154 = vld [vmem:[%s2 + $0x300] sm:$0xff]
  %v155 = vld [vmem:[%s2 + $0x308] sm:$0xff]
  %v156 = vld [vmem:[%s3] sm:$0x3]
  %v158 = vlaneseq
  %v159 = vshrl.u32 %v158, 7
  %v160 = vsub.s32 0, %v159
  %v161 = vrot.slane %v156, %v160
  %v162 = vlaneseq
  %v163 = vshrl.u32 %v162, 7
  %v164 = vsub.s32 1, %v163
  %v165 = vrot.slane %v156, %v164
  %v176 = vunpack.c.l.b16 %v50
  %v177 = vunpack.c.h.b16 %v50
  %v178 = vunpack.c.l.b16 %v51
  %v179 = vunpack.c.h.b16 %v51
  %v180 = vunpack.c.l.b16 %v52
  %v181 = vunpack.c.h.b16 %v52
  %v182 = vunpack.c.l.b16 %v53
  %v183 = vunpack.c.l.b16 %v54
  %v184 = vunpack.c.h.b16 %v54
  %v185 = vunpack.c.l.b16 %v55
  %v186 = vunpack.c.h.b16 %v55
  %v187 = vunpack.c.l.b16 %v56
  %v188 = vunpack.c.h.b16 %v56
  %v189 = vunpack.c.l.b16 %v57
  %v190 = vpack.c.b16 %v183, %v176
  %v191 = vpack.c.b16 %v184, %v177
  %v192 = vpack.c.b16 %v185, %v178
  %v193 = vpack.c.b16 %v186, %v179
  %v194 = vpack.c.b16 %v187, %v180
  %v195 = vpack.c.b16 %v188, %v181
  %v196 = vpack.c.b16 %v189, %v182
  %v301 = vunpack.c.l.b16 %v58
  %v302 = vunpack.c.h.b16 %v58
  %v303 = vunpack.c.l.b16 %v59
  %v304 = vunpack.c.h.b16 %v59
  %v305 = vunpack.c.l.b16 %v60
  %v306 = vunpack.c.h.b16 %v60
  %v307 = vunpack.c.l.b16 %v61
  %v308 = vunpack.c.h.b16 %v61
  %v309 = vunpack.c.l.b16 %v62
  %v310 = vunpack.c.h.b16 %v62
  %v311 = vunpack.c.l.b16 %v63
  %v312 = vunpack.c.h.b16 %v63
  %v313 = vunpack.c.l.b16 %v64
  %v314 = vunpack.c.h.b16 %v64
  %v315 = vunpack.c.l.b16 %v65
  %v316 = vunpack.c.h.b16 %v65
  %v317 = vunpack.c.l.b16 %v66
  %v318 = vunpack.c.h.b16 %v66
  %v319 = vunpack.c.l.b16 %v67
  %v320 = vunpack.c.h.b16 %v67
  %v321 = vunpack.c.l.b16 %v68
  %v322 = vunpack.c.h.b16 %v68
  %v323 = vunpack.c.l.b16 %v69
  %v324 = vunpack.c.h.b16 %v69
  %v325 = vunpack.c.l.b16 %v70
  %v326 = vunpack.c.h.b16 %v70
  %v327 = vunpack.c.l.b16 %v71
  %v328 = vunpack.c.h.b16 %v71
  %v329 = vunpack.c.l.b16 %v72
  %v330 = vunpack.c.h.b16 %v72
  %v331 = vunpack.c.l.b16 %v73
  %v332 = vunpack.c.h.b16 %v73
  %v333 = vunpack.c.l.b16 %v74
  %v334 = vunpack.c.h.b16 %v74
  %v335 = vunpack.c.l.b16 %v75
  %v336 = vunpack.c.h.b16 %v75
  %v337 = vunpack.c.l.b16 %v76
  %v338 = vunpack.c.h.b16 %v76
  %v339 = vunpack.c.l.b16 %v77
  %v340 = vunpack.c.h.b16 %v77
  %v341 = vunpack.c.l.b16 %v78
  %v342 = vunpack.c.h.b16 %v78
  %v343 = vunpack.c.l.b16 %v79
  %v344 = vunpack.c.h.b16 %v79
  %v345 = vunpack.c.l.b16 %v80
  %v346 = vunpack.c.h.b16 %v80
  %v347 = vunpack.c.l.b16 %v81
  %v348 = vunpack.c.h.b16 %v81
  %v349 = vunpack.c.l.b16 %v82
  %v350 = vunpack.c.h.b16 %v82
  %v351 = vunpack.c.l.b16 %v83
  %v352 = vunpack.c.h.b16 %v83
  %v353 = vunpack.c.l.b16 %v84
  %v354 = vunpack.c.h.b16 %v84
  %v355 = vunpack.c.l.b16 %v85
  %v356 = vunpack.c.h.b16 %v85
  %v357 = vunpack.c.l.b16 %v86
  %v358 = vunpack.c.h.b16 %v86
  %v359 = vunpack.c.l.b16 %v87
  %v360 = vunpack.c.h.b16 %v87
  %v361 = vunpack.c.l.b16 %v88
  %v362 = vunpack.c.h.b16 %v88
  %v363 = vunpack.c.l.b16 %v89
  %v364 = vunpack.c.h.b16 %v89
  %v365 = vunpack.c.l.b16 %v90
  %v366 = vunpack.c.h.b16 %v90
  %v367 = vunpack.c.l.b16 %v91
  %v368 = vunpack.c.h.b16 %v91
  %v369 = vunpack.c.l.b16 %v92
  %v370 = vunpack.c.h.b16 %v92
  %v371 = vunpack.c.l.b16 %v93
  %v372 = vunpack.c.h.b16 %v93
  %v373 = vunpack.c.l.b16 %v94
  %v374 = vunpack.c.h.b16 %v94
  %v375 = vunpack.c.l.b16 %v95
  %v376 = vunpack.c.h.b16 %v95
  %v377 = vunpack.c.l.b16 %v96
  %v378 = vunpack.c.h.b16 %v96
  %v379 = vunpack.c.l.b16 %v97
  %v380 = vunpack.c.h.b16 %v97
  %v381 = vunpack.c.l.b16 %v98
  %v382 = vunpack.c.h.b16 %v98
  %v383 = vunpack.c.l.b16 %v99
  %v384 = vunpack.c.h.b16 %v99
  %v385 = vunpack.c.l.b16 %v100
  %v386 = vunpack.c.h.b16 %v100
  %v387 = vunpack.c.l.b16 %v101
  %v388 = vunpack.c.h.b16 %v101
  %v389 = vunpack.c.l.b16 %v102
  %v390 = vunpack.c.h.b16 %v102
  %v391 = vunpack.c.l.b16 %v103
  %v392 = vunpack.c.h.b16 %v103
  %v393 = vunpack.c.l.b16 %v104
  %v394 = vunpack.c.h.b16 %v104
  %v395 = vunpack.c.l.b16 %v105
  %v396 = vunpack.c.h.b16 %v105
  %v397 = vunpack.c.l.b16 %v106
  %v398 = vunpack.c.h.b16 %v106
  %v399 = vunpack.c.l.b16 %v107
  %v400 = vunpack.c.h.b16 %v107
  %v401 = vunpack.c.l.b16 %v108
  %v402 = vunpack.c.h.b16 %v108
  %v403 = vunpack.c.l.b16 %v109
  %v404 = vunpack.c.h.b16 %v109
  %v405 = vunpack.c.l.b16 %v110
  %v406 = vunpack.c.h.b16 %v110
  %v407 = vunpack.c.l.b16 %v111
  %v408 = vunpack.c.h.b16 %v111
  %v409 = vunpack.c.l.b16 %v112
  %v410 = vunpack.c.h.b16 %v112
  %v411 = vunpack.c.l.b16 %v113
  %v412 = vunpack.c.h.b16 %v113
  %v413 = vunpack.c.l.b16 %v114
  %v414 = vunpack.c.h.b16 %v114
  %v415 = vunpack.c.l.b16 %v115
  %v416 = vunpack.c.h.b16 %v115
  %v417 = vunpack.c.l.b16 %v116
  %v418 = vunpack.c.h.b16 %v116
  %v419 = vunpack.c.l.b16 %v117
  %v420 = vunpack.c.h.b16 %v117
  %v421 = vunpack.c.l.b16 %v118
  %v422 = vunpack.c.h.b16 %v118
  %v423 = vunpack.c.l.b16 %v119
  %v424 = vunpack.c.h.b16 %v119
  %v425 = vunpack.c.l.b16 %v120
  %v426 = vunpack.c.h.b16 %v120
  %v427 = vunpack.c.l.b16 %v121
  %v428 = vunpack.c.h.b16 %v121
  %v429 = vunpack.c.l.b16 %v122
  %v430 = vunpack.c.h.b16 %v122
  %v431 = vunpack.c.l.b16 %v123
  %v432 = vunpack.c.h.b16 %v123
  %v433 = vunpack.c.l.b16 %v124
  %v434 = vunpack.c.h.b16 %v124
  %v435 = vunpack.c.l.b16 %v125
  %v436 = vunpack.c.h.b16 %v125
  %v437 = vunpack.c.l.b16 %v126
  %v438 = vunpack.c.h.b16 %v126
  %v439 = vunpack.c.l.b16 %v127
  %v440 = vunpack.c.h.b16 %v127
  %v441 = vunpack.c.l.b16 %v128
  %v442 = vunpack.c.h.b16 %v128
  %v443 = vunpack.c.l.b16 %v129
  %v444 = vunpack.c.h.b16 %v129
  %v445 = vunpack.c.l.b16 %v130
  %v446 = vunpack.c.h.b16 %v130
  %v447 = vunpack.c.l.b16 %v131
  %v448 = vunpack.c.h.b16 %v131
  %v449 = vunpack.c.l.b16 %v132
  %v450 = vunpack.c.h.b16 %v132
  %v451 = vunpack.c.l.b16 %v133
  %v452 = vunpack.c.h.b16 %v133
  %v453 = vunpack.c.l.b16 %v134
  %v454 = vunpack.c.h.b16 %v134
  %v455 = vunpack.c.l.b16 %v135
  %v456 = vunpack.c.h.b16 %v135
  %v457 = vunpack.c.l.b16 %v136
  %v458 = vunpack.c.h.b16 %v136
  %v459 = vunpack.c.l.b16 %v137
  %v460 = vunpack.c.h.b16 %v137
  %v461 = vunpack.c.l.b16 %v138
  %v462 = vunpack.c.h.b16 %v138
  %v463 = vunpack.c.l.b16 %v139
  %v464 = vunpack.c.h.b16 %v139
  %v465 = vunpack.c.l.b16 %v140
  %v466 = vunpack.c.h.b16 %v140
  %v467 = vunpack.c.l.b16 %v141
  %v468 = vunpack.c.h.b16 %v141
  %v469 = vunpack.c.l.b16 %v142
  %v470 = vunpack.c.h.b16 %v142
  %v471 = vunpack.c.l.b16 %v143
  %v472 = vunpack.c.h.b16 %v143
  %v473 = vunpack.c.l.b16 %v144
  %v474 = vunpack.c.h.b16 %v144
  %v475 = vunpack.c.l.b16 %v145
  %v476 = vunpack.c.h.b16 %v145
  %v477 = vunpack.c.l.b16 %v146
  %v478 = vunpack.c.h.b16 %v146
  %v479 = vunpack.c.l.b16 %v147
  %v480 = vunpack.c.h.b16 %v147
  %v481 = vunpack.c.l.b16 %v148
  %v482 = vunpack.c.h.b16 %v148
  %v483 = vunpack.c.l.b16 %v149
  %v484 = vunpack.c.h.b16 %v149
  %v485 = vunpack.c.l.b16 %v150
  %v486 = vunpack.c.h.b16 %v150
  %v487 = vunpack.c.l.b16 %v151
  %v488 = vunpack.c.h.b16 %v151
  %v489 = vunpack.c.l.b16 %v152
  %v490 = vunpack.c.h.b16 %v152
  %v491 = vunpack.c.l.b16 %v153
  %v492 = vunpack.c.h.b16 %v153
  %v493 = vunpack.c.l.b16 %v154
  %v494 = vunpack.c.h.b16 %v154
  %v495 = vunpack.c.l.b16 %v155
  %v496 = vunpack.c.h.b16 %v155
  %v497 = vpack.c.b16 %v303, %v301
  %v498 = vpack.c.b16 %v304, %v302
  %v499 = vpack.c.b16 %v307, %v305
  %v500 = vpack.c.b16 %v308, %v306
  %v501 = vpack.c.b16 %v311, %v309
  %v502 = vpack.c.b16 %v312, %v310
  %v503 = vpack.c.b16 %v315, %v313
  %v504 = vpack.c.b16 %v316, %v314
  %v505 = vpack.c.b16 %v319, %v317
  %v506 = vpack.c.b16 %v320, %v318
  %v507 = vpack.c.b16 %v323, %v321
  %v508 = vpack.c.b16 %v324, %v322
  %v509 = vpack.c.b16 %v327, %v325
  %v510 = vpack.c.b16 %v328, %v326
  %v511 = vpack.c.b16 %v331, %v329
  %v512 = vpack.c.b16 %v332, %v330
  %v513 = vpack.c.b16 %v335, %v333
  %v514 = vpack.c.b16 %v336, %v334
  %v515 = vpack.c.b16 %v339, %v337
  %v516 = vpack.c.b16 %v340, %v338
  %v517 = vpack.c.b16 %v343, %v341
  %v518 = vpack.c.b16 %v344, %v342
  %v519 = vpack.c.b16 %v347, %v345
  %v520 = vpack.c.b16 %v348, %v346
  %v521 = vpack.c.b16 %v351, %v349
  %v522 = vpack.c.b16 %v352, %v350
  %v523 = vpack.c.b16 %v355, %v353
  %v524 = vpack.c.b16 %v356, %v354
  %v525 = vpack.c.b16 %v359, %v357
  %v526 = vpack.c.b16 %v360, %v358
  %v527 = vpack.c.b16 %v363, %v361
  %v528 = vpack.c.b16 %v364, %v362
  %v529 = vpack.c.b16 %v367, %v365
  %v530 = vpack.c.b16 %v368, %v366
  %v531 = vpack.c.b16 %v371, %v369
  %v532 = vpack.c.b16 %v372, %v370
  %v533 = vpack.c.b16 %v375, %v373
  %v534 = vpack.c.b16 %v376, %v374
  %v535 = vpack.c.b16 %v379, %v377
  %v536 = vpack.c.b16 %v380, %v378
  %v537 = vpack.c.b16 %v383, %v381
  %v538 = vpack.c.b16 %v384, %v382
  %v539 = vpack.c.b16 %v387, %v385
  %v540 = vpack.c.b16 %v388, %v386
  %v541 = vpack.c.b16 %v391, %v389
  %v542 = vpack.c.b16 %v392, %v390
  %v543 = vpack.c.b16 %v395, %v393
  %v544 = vpack.c.b16 %v396, %v394
  %v545 = vpack.c.b16 %v399, %v397
  %v546 = vpack.c.b16 %v400, %v398
  %v547 = vpack.c.b16 %v403, %v401
  %v548 = vpack.c.b16 %v404, %v402
  %v549 = vpack.c.b16 %v407, %v405
  %v550 = vpack.c.b16 %v408, %v406
  %v551 = vpack.c.b16 %v411, %v409
  %v552 = vpack.c.b16 %v412, %v410
  %v553 = vpack.c.b16 %v415, %v413
  %v554 = vpack.c.b16 %v416, %v414
  %v555 = vpack.c.b16 %v419, %v417
  %v556 = vpack.c.b16 %v420, %v418
  %v557 = vpack.c.b16 %v423, %v421
  %v558 = vpack.c.b16 %v424, %v422
  %v559 = vpack.c.b16 %v427, %v425
  %v560 = vpack.c.b16 %v428, %v426
  %v561 = vpack.c.b16 %v431, %v429
  %v562 = vpack.c.b16 %v432, %v430
  %v563 = vpack.c.b16 %v435, %v433
  %v564 = vpack.c.b16 %v436, %v434
  %v565 = vpack.c.b16 %v439, %v437
  %v566 = vpack.c.b16 %v440, %v438
  %v567 = vpack.c.b16 %v443, %v441
  %v568 = vpack.c.b16 %v444, %v442
  %v569 = vpack.c.b16 %v447, %v445
  %v570 = vpack.c.b16 %v448, %v446
  %v571 = vpack.c.b16 %v451, %v449
  %v572 = vpack.c.b16 %v452, %v450
  %v573 = vpack.c.b16 %v455, %v453
  %v574 = vpack.c.b16 %v456, %v454
  %v575 = vpack.c.b16 %v459, %v457
  %v576 = vpack.c.b16 %v460, %v458
  %v577 = vpack.c.b16 %v463, %v461
  %v578 = vpack.c.b16 %v464, %v462
  %v579 = vpack.c.b16 %v467, %v465
  %v580 = vpack.c.b16 %v468, %v466
  %v581 = vpack.c.b16 %v471, %v469
  %v582 = vpack.c.b16 %v472, %v470
  %v583 = vpack.c.b16 %v475, %v473
  %v584 = vpack.c.b16 %v476, %v474
  %v585 = vpack.c.b16 %v479, %v477
  %v586 = vpack.c.b16 %v480, %v478
  %v587 = vpack.c.b16 %v483, %v481
  %v588 = vpack.c.b16 %v484, %v482
  %v589 = vpack.c.b16 %v487, %v485
  %v590 = vpack.c.b16 %v488, %v486
  %v591 = vpack.c.b16 %v491, %v489
  %v592 = vpack.c.b16 %v492, %v490
  %v593 = vpack.c.b16 %v495, %v493
  %v594 = vpack.c.b16 %v496, %v494
  %vm693 = vcmask 130048
  %v695 = vsel %vm693, %v196, 0
  %697 = vmatprep.subr.bf16.mxu0 %v498
  %698 = vmatpush1.bf16.msra.mxu0 %v497
  %699 = vmatprep.subr.bf16.mxu0 %v500
  %700 = vmatpush1.bf16.msra.mxu0 %v499
  %701 = vmatprep.subr.bf16.mxu0 %v502
  %702 = vmatpush1.bf16.msra.mxu0 %v501
  %703 = vmatprep.subr.bf16.mxu0 %v504
  %704 = vmatpush1.bf16.msra.mxu0 %v503
  %705 = vmatprep.subr.bf16.mxu0 %v506
  %706 = vmatpush1.bf16.msra.mxu0 %v505
  %707 = vmatprep.subr.bf16.mxu0 %v508
  %708 = vmatpush1.bf16.msra.mxu0 %v507
  %709 = vmatprep.subr.bf16.mxu0 %v510
  %710 = vmatpush1.bf16.msra.mxu0 %v509
  %711 = vmatprep.subr.bf16.mxu0 %v512
  %712 = vmatpush1.bf16.msra.mxu0 %v511
  %713 = vmatprep.subr.bf16.mxu0 %v514
  %714 = vmatpush1.bf16.msra.mxu0 %v513
  %715 = vmatprep.subr.bf16.mxu0 %v516
  %716 = vmatpush1.bf16.msra.mxu0 %v515
  %717 = vmatprep.subr.bf16.mxu0 %v518
  %718 = vmatpush1.bf16.msra.mxu0 %v517
  %719 = vmatprep.subr.bf16.mxu0 %v520
  %720 = vmatpush1.bf16.msra.mxu0 %v519
  %721 = vmatprep.subr.bf16.mxu0 %v522
  %722 = vmatpush1.bf16.msra.mxu0 %v521
  %723 = vmatprep.subr.bf16.mxu0 %v524
  %724 = vmatpush1.bf16.msra.mxu0 %v523
  %725 = vmatprep.subr.bf16.mxu0 %v526
  %726 = vmatpush1.bf16.msra.mxu0 %v525
  %727 = vmatprep.subr.bf16.mxu0 %v528
  %728 = vmatpush1.bf16.msra.mxu0 %v527
  %729 = vmatprep.mubr.bf16.mxu0 %v191
  %730 = vmatmul.mubr.bf16.gmra.mrb[0].mxu0 %v190
  %v731 = vpop.f32.mrb[0].mxu0
  %v732 = vadd.f32 %v161, %v731
  %v733 = vpop.f32.mrb[0].mxu0
  %v734 = vadd.f32 %v165, %v733
  %v735 = vpop.f32.mrb[0].mxu0
  %v736 = vadd.f32 %v161, %v735
  %v737 = vpop.f32.mrb[0].mxu0
  %v738 = vadd.f32 %v165, %v737
  %739 = vdwg.mxu0
  %740 = vmatprep.subr.bf16.mxu0 %v530
  %741 = vmatpush1.bf16.msra.mxu0 %v529
  %742 = vmatprep.subr.bf16.mxu0 %v532
  %743 = vmatpush1.bf16.msra.mxu0 %v531
  %744 = vmatprep.subr.bf16.mxu0 %v534
  %745 = vmatpush1.bf16.msra.mxu0 %v533
  %746 = vmatprep.subr.bf16.mxu0 %v536
  %747 = vmatpush1.bf16.msra.mxu0 %v535
  %748 = vmatprep.subr.bf16.mxu0 %v538
  %749 = vmatpush1.bf16.msra.mxu0 %v537
  %750 = vmatprep.subr.bf16.mxu0 %v540
  %751 = vmatpush1.bf16.msra.mxu0 %v539
  %752 = vmatprep.subr.bf16.mxu0 %v542
  %753 = vmatpush1.bf16.msra.mxu0 %v541
  %754 = vmatprep.subr.bf16.mxu0 %v544
  %755 = vmatpush1.bf16.msra.mxu0 %v543
  %756 = vmatprep.subr.bf16.mxu0 %v546
  %757 = vmatpush1.bf16.msra.mxu0 %v545
  %758 = vmatprep.subr.bf16.mxu0 %v548
  %759 = vmatpush1.bf16.msra.mxu0 %v547
  %760 = vmatprep.subr.bf16.mxu0 %v550
  %761 = vmatpush1.bf16.msra.mxu0 %v549
  %762 = vmatprep.subr.bf16.mxu0 %v552
  %763 = vmatpush1.bf16.msra.mxu0 %v551
  %764 = vmatprep.subr.bf16.mxu0 %v554
  %765 = vmatpush1.bf16.msra.mxu0 %v553
  %766 = vmatprep.subr.bf16.mxu0 %v556
  %767 = vmatpush1.bf16.msra.mxu0 %v555
  %768 = vmatprep.subr.bf16.mxu0 %v558
  %769 = vmatpush1.bf16.msra.mxu0 %v557
  %770 = vmatprep.subr.bf16.mxu0 %v560
  %771 = vmatpush1.bf16.msra.mxu0 %v559
  %772 = vmatprep.mubr.bf16.mxu0 %v193
  %773 = vmatmul.mubr.bf16.gmra.mrb[0].mxu0 %v192
  %v774 = vpop.f32.mrb[0].mxu0
  %v775 = vadd.f32 %v732, %v774
  %v776 = vpop.f32.mrb[0].mxu0
  %v777 = vadd.f32 %v734, %v776
  %v778 = vpop.f32.mrb[0].mxu0
  %v779 = vadd.f32 %v736, %v778
  %v780 = vpop.f32.mrb[0].mxu0
  %v781 = vadd.f32 %v738, %v780
  %782 = vdwg.mxu0
  %783 = vmatprep.subr.bf16.mxu0 %v562
  %784 = vmatpush1.bf16.msra.mxu0 %v561
  %785 = vmatprep.subr.bf16.mxu0 %v564
  %786 = vmatpush1.bf16.msra.mxu0 %v563
  %787 = vmatprep.subr.bf16.mxu0 %v566
  %788 = vmatpush1.bf16.msra.mxu0 %v565
  %789 = vmatprep.subr.bf16.mxu0 %v568
  %790 = vmatpush1.bf16.msra.mxu0 %v567
  %791 = vmatprep.subr.bf16.mxu0 %v570
  %792 = vmatpush1.bf16.msra.mxu0 %v569
  %793 = vmatprep.subr.bf16.mxu0 %v572
  %794 = vmatpush1.bf16.msra.mxu0 %v571
  %795 = vmatprep.subr.bf16.mxu0 %v574
  %796 = vmatpush1.bf16.msra.mxu0 %v573
  %797 = vmatprep.subr.bf16.mxu0 %v576
  %798 = vmatpush1.bf16.msra.mxu0 %v575
  %799 = vmatprep.subr.bf16.mxu0 %v578
  %800 = vmatpush1.bf16.msra.mxu0 %v577
  %801 = vmatprep.subr.bf16.mxu0 %v580
  %802 = vmatpush1.bf16.msra.mxu0 %v579
  %803 = vmatprep.subr.bf16.mxu0 %v582
  %804 = vmatpush1.bf16.msra.mxu0 %v581
  %805 = vmatprep.subr.bf16.mxu0 %v584
  %806 = vmatpush1.bf16.msra.mxu0 %v583
  %807 = vmatprep.subr.bf16.mxu0 %v586
  %808 = vmatpush1.bf16.msra.mxu0 %v585
  %809 = vmatprep.subr.bf16.mxu0 %v588
  %810 = vmatpush1.bf16.msra.mxu0 %v587
  %811 = vmatprep.subr.bf16.mxu0 %v590
  %812 = vmatpush1.bf16.msra.mxu0 %v589
  %813 = vmatprep.subr.bf16.mxu0 %v592
  %814 = vmatpush1.bf16.msra.mxu0 %v591
  %815 = vmatprep.mubr.bf16.mxu0 %v195
  %816 = vmatmul.mubr.bf16.gmra.mrb[0].mxu0 %v194
  %v817 = vpop.f32.mrb[0].mxu0
  %v818 = vadd.f32 %v775, %v817
  %v819 = vpop.f32.mrb[0].mxu0
  %v820 = vadd.f32 %v777, %v819
  %v821 = vpop.f32.mrb[0].mxu0
  %v822 = vadd.f32 %v779, %v821
  %v823 = vpop.f32.mrb[0].mxu0
  %v824 = vadd.f32 %v781, %v823
  %825 = vdwg.mxu0
  %826 = vmatprep.subr.bf16.mxu0 %v594
  %827 = vmatpush1.bf16.msra.mxu0 %v593
  %828 = vmatprep.subr.bf16.mxu0 0
  %829 = vmatpush1.bf16.msra.mxu0 0
  %830 = vmatprep.subr.bf16.mxu0 0
  %831 = vmatpush1.bf16.msra.mxu0 0
  %832 = vmatprep.subr.bf16.mxu0 0
  %833 = vmatpush1.bf16.msra.mxu0 0
  %834 = vmatprep.subr.bf16.mxu0 0
  %835 = vmatpush1.bf16.msra.mxu0 0
  %836 = vmatprep.subr.bf16.mxu0 0
  %837 = vmatpush1.bf16.msra.mxu0 0
  %838 = vmatprep.subr.bf16.mxu0 0
  %839 = vmatpush1.bf16.msra.mxu0 0
  %840 = vmatprep.subr.bf16.mxu0 0
  %841 = vmatpush1.bf16.msra.mxu0 0
  %842 = vmatprep.subr.bf16.mxu0 0
  %843 = vmatpush1.bf16.msra.mxu0 0
  %844 = vmatprep.subr.bf16.mxu0 0
  %845 = vmatpush1.bf16.msra.mxu0 0
  %846 = vmatprep.subr.bf16.mxu0 0
  %847 = vmatpush1.bf16.msra.mxu0 0
  %848 = vmatprep.subr.bf16.mxu0 0
  %849 = vmatpush1.bf16.msra.mxu0 0
  %850 = vmatprep.subr.bf16.mxu0 0
  %851 = vmatpush1.bf16.msra.mxu0 0
  %852 = vmatprep.subr.bf16.mxu0 0
  %853 = vmatpush1.bf16.msra.mxu0 0
  %854 = vmatprep.subr.bf16.mxu0 0
  %855 = vmatpush1.bf16.msra.mxu0 0
  %856 = vmatprep.subr.bf16.mxu0 0
  %857 = vmatpush1.bf16.msra.mxu0 0
  %858 = vmatprep.mubr.bf16.mxu0 0
  %859 = vmatmul.mubr.bf16.gmra.mrb[0].mxu0 %v695
  %v860 = vpop.f32.mrb[0].mxu0
  %v861 = vadd.f32 %v818, %v860
  %v862 = vpop.f32.mrb[0].mxu0
  %v863 = vadd.f32 %v820, %v862
  %v864 = vpop.f32.mrb[0].mxu0
  %v865 = vadd.f32 %v822, %v864
  %v866 = vpop.f32.mrb[0].mxu0
  %v867 = vadd.f32 %v824, %v866
  %868 = vdwg.mxu0
  %v869 = vmax.f32 %v861, 0.0
  %v870 = vmax.f32 %v863, 0.0
  %v871 = vmax.f32 %v865, 0.0
  %v872 = vmax.f32 %v867, 0.0
  %v873 = vpack.c.bf16 %v871, %v869
  %v874 = vpack.c.bf16 %v872, %v870
  %v875 = vld [vmem:[%s4] sm:$0xf]
  %v876 = vld [vmem:[%s4 + $0x4] sm:$0xf]
  %v877 = vld [vmem:[%s4 + $0x8] sm:$0xf]
  %v878 = vld [vmem:[%s4 + $0xc] sm:$0xf]
  %v879 = vld [vmem:[%s4 + $0x10] sm:$0xf]
  %v880 = vld [vmem:[%s4 + $0x14] sm:$0xf]
  %v881 = vld [vmem:[%s4 + $0x18] sm:$0xf]
  %v882 = vld [vmem:[%s4 + $0x1c] sm:$0xf]
  %v883 = vld [vmem:[%s4 + $0x20] sm:$0xf]
  %v884 = vld [vmem:[%s4 + $0x24] sm:$0xf]
  %v885 = vld [vmem:[%s4 + $0x28] sm:$0xf]
  %v886 = vld [vmem:[%s4 + $0x2c] sm:$0xf]
  %v887 = vld [vmem:[%s4 + $0x30] sm:$0xf]
  %v888 = vld [vmem:[%s4 + $0x34] sm:$0xf]
  %v889 = vld [vmem:[%s4 + $0x38] sm:$0xf]
  %v890 = vld [vmem:[%s4 + $0x3c] sm:$0xf]
  %v891 = vld [vmem:[%s4 + $0x40] sm:$0xf]
  %v892 = vld [vmem:[%s4 + $0x44] sm:$0xf]
  %v893 = vld [vmem:[%s4 + $0x48] sm:$0xf]
  %v894 = vld [vmem:[%s4 + $0x4c] sm:$0xf]
  %v895 = vld [vmem:[%s4 + $0x50] sm:$0xf]
  %v896 = vld [vmem:[%s4 + $0x54] sm:$0xf]
  %v897 = vld [vmem:[%s4 + $0x58] sm:$0xf]
  %v898 = vld [vmem:[%s4 + $0x5c] sm:$0xf]
  %v899 = vld [vmem:[%s4 + $0x60] sm:$0xf]
  %v900 = vld [vmem:[%s4 + $0x64] sm:$0xf]
  %v901 = vld [vmem:[%s4 + $0x68] sm:$0xf]
  %v902 = vld [vmem:[%s4 + $0x6c] sm:$0xf]
  %v903 = vld [vmem:[%s4 + $0x70] sm:$0xf]
  %v904 = vld [vmem:[%s4 + $0x74] sm:$0xf]
  %v905 = vld [vmem:[%s4 + $0x78] sm:$0xf]
  %v906 = vld [vmem:[%s4 + $0x7c] sm:$0xf]
  %v907 = vld [vmem:[%s5] sm:$0x1]
  %v909 = vlaneseq
  %v910 = vshrl.u32 %v909, 7
  %v911 = vsub.s32 0, %v910
  %v912 = vrot.slane %v907, %v911
  %v946 = vunpack.c.l.b16 %v875
  %v947 = vunpack.c.l.b16 %v876
  %v948 = vunpack.c.l.b16 %v877
  %v949 = vunpack.c.l.b16 %v878
  %v950 = vunpack.c.l.b16 %v879
  %v951 = vunpack.c.l.b16 %v880
  %v952 = vunpack.c.l.b16 %v881
  %v953 = vunpack.c.l.b16 %v882
  %v954 = vunpack.c.l.b16 %v883
  %v955 = vunpack.c.l.b16 %v884
  %v956 = vunpack.c.l.b16 %v885
  %v957 = vunpack.c.l.b16 %v886
  %v958 = vunpack.c.l.b16 %v887
  %v959 = vunpack.c.l.b16 %v888
  %v960 = vunpack.c.l.b16 %v889
  %v961 = vunpack.c.l.b16 %v890
  %v962 = vunpack.c.l.b16 %v891
  %v963 = vunpack.c.l.b16 %v892
  %v964 = vunpack.c.l.b16 %v893
  %v965 = vunpack.c.l.b16 %v894
  %v966 = vunpack.c.l.b16 %v895
  %v967 = vunpack.c.l.b16 %v896
  %v968 = vunpack.c.l.b16 %v897
  %v969 = vunpack.c.l.b16 %v898
  %v970 = vunpack.c.l.b16 %v899
  %v971 = vunpack.c.l.b16 %v900
  %v972 = vunpack.c.l.b16 %v901
  %v973 = vunpack.c.l.b16 %v902
  %v974 = vunpack.c.l.b16 %v903
  %v975 = vunpack.c.l.b16 %v904
  %v976 = vunpack.c.l.b16 %v905
  %v977 = vunpack.c.l.b16 %v906
  %v978 = vpack.c.b16 %v947, %v946
  %v979 = vpack.c.b16 %v949, %v948
  %v980 = vpack.c.b16 %v951, %v950
  %v981 = vpack.c.b16 %v953, %v952
  %v982 = vpack.c.b16 %v955, %v954
  %v983 = vpack.c.b16 %v957, %v956
  %v984 = vpack.c.b16 %v959, %v958
  %v985 = vpack.c.b16 %v961, %v960
  %v986 = vpack.c.b16 %v963, %v962
  %v987 = vpack.c.b16 %v965, %v964
  %v988 = vpack.c.b16 %v967, %v966
  %v989 = vpack.c.b16 %v969, %v968
  %v990 = vpack.c.b16 %v971, %v970
  %v991 = vpack.c.b16 %v973, %v972
  %v992 = vpack.c.b16 %v975, %v974
  %v993 = vpack.c.b16 %v977, %v976
  %1010 = vmatprep.subr.bf16.mxu0 0
  %1011 = vmatpush1.bf16.msra.mxu0 %v978
  %1012 = vmatprep.subr.bf16.mxu0 0
  %1013 = vmatpush1.bf16.msra.mxu0 %v979
  %1014 = vmatprep.subr.bf16.mxu0 0
  %1015 = vmatpush1.bf16.msra.mxu0 %v980
  %1016 = vmatprep.subr.bf16.mxu0 0
  %1017 = vmatpush1.bf16.msra.mxu0 %v981
  %1018 = vmatprep.subr.bf16.mxu0 0
  %1019 = vmatpush1.bf16.msra.mxu0 %v982
  %1020 = vmatprep.subr.bf16.mxu0 0
  %1021 = vmatpush1.bf16.msra.mxu0 %v983
  %1022 = vmatprep.subr.bf16.mxu0 0
  %1023 = vmatpush1.bf16.msra.mxu0 %v984
  %1024 = vmatprep.subr.bf16.mxu0 0
  %1025 = vmatpush1.bf16.msra.mxu0 %v985
  %1026 = vmatprep.subr.bf16.mxu0 0
  %1027 = vmatpush1.bf16.msra.mxu0 %v986
  %1028 = vmatprep.subr.bf16.mxu0 0
  %1029 = vmatpush1.bf16.msra.mxu0 %v987
  %1030 = vmatprep.subr.bf16.mxu0 0
  %1031 = vmatpush1.bf16.msra.mxu0 %v988
  %1032 = vmatprep.subr.bf16.mxu0 0
  %1033 = vmatpush1.bf16.msra.mxu0 %v989
  %1034 = vmatprep.subr.bf16.mxu0 0
  %1035 = vmatpush1.bf16.msra.mxu0 %v990
  %1036 = vmatprep.subr.bf16.mxu0 0
  %1037 = vmatpush1.bf16.msra.mxu0 %v991
  %1038 = vmatprep.subr.bf16.mxu0 0
  %1039 = vmatpush1.bf16.msra.mxu0 %v992
  %1040 = vmatprep.subr.bf16.mxu0 0
  %1041 = vmatpush1.bf16.msra.mxu0 %v993
  %1042 = vmatprep.mubr.bf16.mxu0 %v874
  %1043 = vmatmul.mubr.bf16.gmra.mrb[0].mxu0 %v873
  %v1044 = vpop.f32.mrb[0].mxu0
  %v1045 = vadd.f32 %v912, %v1044
  %v1046 = vpop.f32.mrb[0].mxu0
  %v1047 = vpop.f32.mrb[0].mxu0
  %v1048 = vadd.f32 %v912, %v1047
  %v1049 = vpop.f32.mrb[0].mxu0
  %1050 = vdwg.mxu0
  %v1051 = vmax.f32 %v1045, 0.0
  %v1052 = vmax.f32 %v1048, 0.0
  %v1053 = vpack.c.bf16 %v1052, %v1051
  %v1054 = vld [vmem:[%s6] sm:$0xf]
  %v1055 = vld [vmem:[%s6 + $0x4] sm:$0xf]
  %v1056 = vld [vmem:[%s6 + $0x8] sm:$0xf]
  %v1057 = vld [vmem:[%s6 + $0xc] sm:$0xf]
  %v1058 = vld [vmem:[%s6 + $0x10] sm:$0xf]
  %v1059 = vld [vmem:[%s6 + $0x14] sm:$0xf]
  %v1060 = vld [vmem:[%s6 + $0x18] sm:$0xf]
  %v1061 = vld [vmem:[%s6 + $0x1c] sm:$0xf]
  %v1062 = vld [vmem:[%s7] sm:$0x1]
  %v1064 = vlaneseq
  %v1065 = vshrl.u32 %v1064, 7
  %v1066 = vsub.s32 0, %v1065
  %v1067 = vrot.slane %v1062, %v1066
  %v1077 = vunpack.c.l.b16 %v1054
  %v1078 = vunpack.c.l.b16 %v1055
  %v1079 = vunpack.c.l.b16 %v1056
  %v1080 = vunpack.c.l.b16 %v1057
  %v1081 = vunpack.c.l.b16 %v1058
  %v1082 = vunpack.c.l.b16 %v1059
  %v1083 = vunpack.c.l.b16 %v1060
  %v1084 = vunpack.c.l.b16 %v1061
  %v1085 = vpack.c.b16 %v1078, %v1077
  %v1086 = vpack.c.b16 %v1080, %v1079
  %v1087 = vpack.c.b16 %v1082, %v1081
  %v1088 = vpack.c.b16 %v1084, %v1083
  %vm1093 = vcmask 523264
  %v1095 = vsel %vm1093, %v1053, 0
  %1097 = vmatprep.subr.bf16.mxu0 0
  %1098 = vmatpush1.bf16.msra.mxu0 %v1085
  %1099 = vmatprep.subr.bf16.mxu0 0
  %1100 = vmatpush1.bf16.msra.mxu0 %v1086
  %1101 = vmatprep.subr.bf16.mxu0 0
  %1102 = vmatpush1.bf16.msra.mxu0 %v1087
  %1103 = vmatprep.subr.bf16.mxu0 0
  %1104 = vmatpush1.bf16.msra.mxu0 %v1088
  %1105 = vmatprep.subr.bf16.mxu0 0
  %1106 = vmatpush1.bf16.msra.mxu0 0
  %1107 = vmatprep.subr.bf16.mxu0 0
  %1108 = vmatpush1.bf16.msra.mxu0 0
  %1109 = vmatprep.subr.bf16.mxu0 0
  %1110 = vmatpush1.bf16.msra.mxu0 0
  %1111 = vmatprep.subr.bf16.mxu0 0
  %1112 = vmatpush1.bf16.msra.mxu0 0
  %1113 = vmatprep.subr.bf16.mxu0 0
  %1114 = vmatpush1.bf16.msra.mxu0 0
  %1115 = vmatprep.subr.bf16.mxu0 0
  %1116 = vmatpush1.bf16.msra.mxu0 0
  %1117 = vmatprep.subr.bf16.mxu0 0
  %1118 = vmatpush1.bf16.msra.mxu0 0
  %1119 = vmatprep.subr.bf16.mxu0 0
  %1120 = vmatpush1.bf16.msra.mxu0 0
  %1121 = vmatprep.subr.bf16.mxu0 0
  %1122 = vmatpush1.bf16.msra.mxu0 0
  %1123 = vmatprep.subr.bf16.mxu0 0
  %1124 = vmatpush1.bf16.msra.mxu0 0
  %1125 = vmatprep.subr.bf16.mxu0 0
  %1126 = vmatpush1.bf16.msra.mxu0 0
  %1127 = vmatprep.subr.bf16.mxu0 0
  %1128 = vmatpush1.bf16.msra.mxu0 0
  %1129 = vmatprep.mubr.bf16.mxu0 0
  %1130 = vmatmul.mubr.bf16.gmra.mrb[0].mxu0 %v1095
  %v1131 = vpop.f32.mrb[0].mxu0
  %v1132 = vadd.f32 %v1067, %v1131
  %v1133 = vpop.f32.mrb[0].mxu0
  %v1134 = vpop.f32.mrb[0].mxu0
  %v1135 = vadd.f32 %v1067, %v1134
  %v1136 = vpop.f32.mrb[0].mxu0
  %1137 = vdwg.mxu0
  %v1138 = vmax.f32 %v1132, 0.0
  %v1139 = vmax.f32 %v1135, 0.0
  %v1140 = vld [vmem:[%s1] sm:$0xff]
  %v1141 = vld [vmem:[%s1 + $0x8] sm:$0xff]
  %v1142 = vmul.f32 %v1138, %v1140
  %v1143 = vmul.f32 %v1139, %v1141
  %1144 = vrot.lane.b32.xlu0 %v1142, 64
  %v1145 = vpop.permute.xlu0 %1144
  %1146 = vrot.lane.b32.xlu0 %v1143, 64
  %v1147 = vpop.permute.xlu0 %1146
  %v1148 = vadd.f32 %v1138, %v1145
  %v1149 = vadd.f32 %v1139, %v1147
  %v1150 = vpack.c.bf16 %v1149, %v1148
  %v1151 = vld [vmem:[%s8] sm:$0xf]
  %v1152 = vld [vmem:[%s8 + $0x4] sm:$0xf]
  %v1153 = vld [vmem:[%s8 + $0x8] sm:$0xf]
  %v1154 = vld [vmem:[%s8 + $0xc] sm:$0xf]
  %v1155 = vld [vmem:[%s8 + $0x10] sm:$0xf]
  %v1156 = vld [vmem:[%s8 + $0x14] sm:$0xf]
  %v1157 = vld [vmem:[%s8 + $0x18] sm:$0xf]
  %v1158 = vld [vmem:[%s8 + $0x1c] sm:$0xf]
  %v1159 = vld [vmem:[%s8 + $0x20] sm:$0xf]
  %v1160 = vld [vmem:[%s8 + $0x24] sm:$0xf]
  %v1161 = vld [vmem:[%s8 + $0x28] sm:$0xf]
  %v1162 = vld [vmem:[%s8 + $0x2c] sm:$0xf]
  %v1163 = vld [vmem:[%s8 + $0x30] sm:$0xf]
  %v1164 = vld [vmem:[%s8 + $0x34] sm:$0xf]
  %v1165 = vld [vmem:[%s8 + $0x38] sm:$0xf]
  %v1166 = vld [vmem:[%s8 + $0x3c] sm:$0xf]
  %v1167 = vld [vmem:[%s9] sm:$0x1]
  %v1169 = vlaneseq
  %v1170 = vshrl.u32 %v1169, 7
  %v1171 = vsub.s32 0, %v1170
  %v1172 = vrot.slane %v1167, %v1171
  %v1190 = vunpack.c.l.b16 %v1151
  %v1191 = vunpack.c.l.b16 %v1152
  %v1192 = vunpack.c.l.b16 %v1153
  %v1193 = vunpack.c.l.b16 %v1154
  %v1194 = vunpack.c.l.b16 %v1155
  %v1195 = vunpack.c.l.b16 %v1156
  %v1196 = vunpack.c.l.b16 %v1157
  %v1197 = vunpack.c.l.b16 %v1158
  %v1198 = vunpack.c.l.b16 %v1159
  %v1199 = vunpack.c.l.b16 %v1160
  %v1200 = vunpack.c.l.b16 %v1161
  %v1201 = vunpack.c.l.b16 %v1162
  %v1202 = vunpack.c.l.b16 %v1163
  %v1203 = vunpack.c.l.b16 %v1164
  %v1204 = vunpack.c.l.b16 %v1165
  %v1205 = vunpack.c.l.b16 %v1166
  %v1206 = vpack.c.b16 %v1191, %v1190
  %v1207 = vpack.c.b16 %v1193, %v1192
  %v1208 = vpack.c.b16 %v1195, %v1194
  %v1209 = vpack.c.b16 %v1197, %v1196
  %v1210 = vpack.c.b16 %v1199, %v1198
  %v1211 = vpack.c.b16 %v1201, %v1200
  %v1212 = vpack.c.b16 %v1203, %v1202
  %v1213 = vpack.c.b16 %v1205, %v1204
  %1222 = vmatprep.subr.bf16.mxu0 0
  %1223 = vmatpush1.bf16.msra.mxu0 %v1206
  %1224 = vmatprep.subr.bf16.mxu0 0
  %1225 = vmatpush1.bf16.msra.mxu0 %v1207
  %1226 = vmatprep.subr.bf16.mxu0 0
  %1227 = vmatpush1.bf16.msra.mxu0 %v1208
  %1228 = vmatprep.subr.bf16.mxu0 0
  %1229 = vmatpush1.bf16.msra.mxu0 %v1209
  %1230 = vmatprep.subr.bf16.mxu0 0
  %1231 = vmatpush1.bf16.msra.mxu0 %v1210
  %1232 = vmatprep.subr.bf16.mxu0 0
  %1233 = vmatpush1.bf16.msra.mxu0 %v1211
  %1234 = vmatprep.subr.bf16.mxu0 0
  %1235 = vmatpush1.bf16.msra.mxu0 %v1212
  %1236 = vmatprep.subr.bf16.mxu0 0
  %1237 = vmatpush1.bf16.msra.mxu0 %v1213
  %1238 = vmatprep.subr.bf16.mxu0 0
  %1239 = vmatpush1.bf16.msra.mxu0 0
  %1240 = vmatprep.subr.bf16.mxu0 0
  %1241 = vmatpush1.bf16.msra.mxu0 0
  %1242 = vmatprep.subr.bf16.mxu0 0
  %1243 = vmatpush1.bf16.msra.mxu0 0
  %1244 = vmatprep.subr.bf16.mxu0 0
  %1245 = vmatpush1.bf16.msra.mxu0 0
  %1246 = vmatprep.subr.bf16.mxu0 0
  %1247 = vmatpush1.bf16.msra.mxu0 0
  %1248 = vmatprep.subr.bf16.mxu0 0
  %1249 = vmatpush1.bf16.msra.mxu0 0
  %1250 = vmatprep.subr.bf16.mxu0 0
  %1251 = vmatpush1.bf16.msra.mxu0 0
  %1252 = vmatprep.subr.bf16.mxu0 0
  %1253 = vmatpush1.bf16.msra.mxu0 0
  %1254 = vmatprep.mubr.bf16.mxu0 0
  %1255 = vmatmul.mubr.bf16.gmra.mrb[0].mxu0 %v1150
  %v1256 = vpop.f32.mrb[0].mxu0
  %v1257 = vadd.f32 %v1172, %v1256
  %v1258 = vpop.f32.mrb[0].mxu0
  %v1259 = vpop.f32.mrb[0].mxu0
  %v1260 = vadd.f32 %v1172, %v1259
  %v1261 = vpop.f32.mrb[0].mxu0
  %1262 = vdwg.mxu0
  %v1263 = vmax.f32 %v1257, 0.0
  %v1264 = vmax.f32 %v1260, 0.0
  %v1265 = vpack.c.bf16 %v1264, %v1263
  %v1266 = vld [vmem:[%s10] sm:$0xff]
  %v1267 = vld [vmem:[%s10 + $0x8] sm:$0xff]
  %v1268 = vld [vmem:[%s10 + $0x10] sm:$0xff]
  %v1269 = vld [vmem:[%s10 + $0x18] sm:$0xff]
  %v1270 = vld [vmem:[%s10 + $0x20] sm:$0xff]
  %v1271 = vld [vmem:[%s10 + $0x28] sm:$0xff]
  %v1272 = vld [vmem:[%s10 + $0x30] sm:$0xff]
  %v1273 = vld [vmem:[%s10 + $0x38] sm:$0xff]
  %v1274 = vld [vmem:[%s11] sm:$0x3]
  %v1276 = vlaneseq
  %v1277 = vshrl.u32 %v1276, 7
  %v1278 = vsub.s32 0, %v1277
  %v1279 = vrot.slane %v1274, %v1278
  %v1280 = vlaneseq
  %v1281 = vshrl.u32 %v1280, 7
  %v1282 = vsub.s32 1, %v1281
  %v1283 = vrot.slane %v1274, %v1282
  %v1294 = vunpack.c.l.b16 %v1266
  %v1295 = vunpack.c.h.b16 %v1266
  %v1296 = vunpack.c.l.b16 %v1267
  %v1297 = vunpack.c.h.b16 %v1267
  %v1298 = vunpack.c.l.b16 %v1268
  %v1299 = vunpack.c.h.b16 %v1268
  %v1300 = vunpack.c.l.b16 %v1269
  %v1301 = vunpack.c.h.b16 %v1269
  %v1302 = vunpack.c.l.b16 %v1270
  %v1303 = vunpack.c.h.b16 %v1270
  %v1304 = vunpack.c.l.b16 %v1271
  %v1305 = vunpack.c.h.b16 %v1271
  %v1306 = vunpack.c.l.b16 %v1272
  %v1307 = vunpack.c.h.b16 %v1272
  %v1308 = vunpack.c.l.b16 %v1273
  %v1309 = vunpack.c.h.b16 %v1273
  %v1310 = vpack.c.b16 %v1296, %v1294
  %v1311 = vpack.c.b16 %v1297, %v1295
  %v1312 = vpack.c.b16 %v1300, %v1298
  %v1313 = vpack.c.b16 %v1301, %v1299
  %v1314 = vpack.c.b16 %v1304, %v1302
  %v1315 = vpack.c.b16 %v1305, %v1303
  %v1316 = vpack.c.b16 %v1308, %v1306
  %v1317 = vpack.c.b16 %v1309, %v1307
  %v1327 = vsel %vm1093, %v1265, 0
  %1329 = vmatprep.subr.bf16.mxu0 %v1311
  %1330 = vmatpush1.bf16.msra.mxu0 %v1310
  %1331 = vmatprep.subr.bf16.mxu0 %v1313
  %1332 = vmatpush1.bf16.msra.mxu0 %v1312
  %1333 = vmatprep.subr.bf16.mxu0 %v1315
  %1334 = vmatpush1.bf16.msra.mxu0 %v1314
  %1335 = vmatprep.subr.bf16.mxu0 %v1317
  %1336 = vmatpush1.bf16.msra.mxu0 %v1316
  %1337 = vmatprep.subr.bf16.mxu0 0
  %1338 = vmatpush1.bf16.msra.mxu0 0
  %1339 = vmatprep.subr.bf16.mxu0 0
  %1340 = vmatpush1.bf16.msra.mxu0 0
  %1341 = vmatprep.subr.bf16.mxu0 0
  %1342 = vmatpush1.bf16.msra.mxu0 0
  %1343 = vmatprep.subr.bf16.mxu0 0
  %1344 = vmatpush1.bf16.msra.mxu0 0
  %1345 = vmatprep.subr.bf16.mxu0 0
  %1346 = vmatpush1.bf16.msra.mxu0 0
  %1347 = vmatprep.subr.bf16.mxu0 0
  %1348 = vmatpush1.bf16.msra.mxu0 0
  %1349 = vmatprep.subr.bf16.mxu0 0
  %1350 = vmatpush1.bf16.msra.mxu0 0
  %1351 = vmatprep.subr.bf16.mxu0 0
  %1352 = vmatpush1.bf16.msra.mxu0 0
  %1353 = vmatprep.subr.bf16.mxu0 0
  %1354 = vmatpush1.bf16.msra.mxu0 0
  %1355 = vmatprep.subr.bf16.mxu0 0
  %1356 = vmatpush1.bf16.msra.mxu0 0
  %1357 = vmatprep.subr.bf16.mxu0 0
  %1358 = vmatpush1.bf16.msra.mxu0 0
  %1359 = vmatprep.subr.bf16.mxu0 0
  %1360 = vmatpush1.bf16.msra.mxu0 0
  %1361 = vmatprep.mubr.bf16.mxu0 0
  %1362 = vmatmul.mubr.bf16.gmra.mrb[0].mxu0 %v1327
  %v1363 = vpop.f32.mrb[0].mxu0
  %v1364 = vadd.f32 %v1279, %v1363
  %v1365 = vpop.f32.mrb[0].mxu0
  %v1366 = vadd.f32 %v1283, %v1365
  %v1367 = vpop.f32.mrb[0].mxu0
  %v1368 = vadd.f32 %v1279, %v1367
  %v1369 = vpop.f32.mrb[0].mxu0
  %v1370 = vadd.f32 %v1283, %v1369
  %1371 = vdwg.mxu0
  %v1372 = vmax.f32 %v1364, 0.0
  %v1373 = vmax.f32 %v1366, 0.0
  %v1374 = vmax.f32 %v1368, 0.0
  %v1375 = vmax.f32 %v1370, 0.0
  %v1376 = vpack.c.bf16 %v1374, %v1372
  %v1377 = vpack.c.bf16 %v1375, %v1373
  %v1378 = vld [vmem:[%s12] sm:$0xff]
  %v1379 = vld [vmem:[%s12 + $0x8] sm:$0xff]
  %v1380 = vld [vmem:[%s12 + $0x10] sm:$0xff]
  %v1381 = vld [vmem:[%s12 + $0x18] sm:$0xf]
  %v1382 = vld [vmem:[%s12 + $0x1c] sm:$0xff]
  %v1383 = vld [vmem:[%s12 + $0x24] sm:$0xff]
  %v1384 = vld [vmem:[%s12 + $0x2c] sm:$0xff]
  %v1385 = vld [vmem:[%s12 + $0x34] sm:$0xf]
  %v1386 = vld [vmem:[%s12 + $0x38] sm:$0xff]
  %v1387 = vld [vmem:[%s12 + $0x40] sm:$0xff]
  %v1388 = vld [vmem:[%s12 + $0x48] sm:$0xff]
  %v1389 = vld [vmem:[%s12 + $0x50] sm:$0xf]
  %v1390 = vld [vmem:[%s12 + $0x54] sm:$0xff]
  %v1391 = vld [vmem:[%s12 + $0x5c] sm:$0xff]
  %v1392 = vld [vmem:[%s12 + $0x64] sm:$0xff]
  %v1393 = vld [vmem:[%s12 + $0x6c] sm:$0xf]
  %v1394 = vld [vmem:[%s12 + $0x70] sm:$0xff]
  %v1395 = vld [vmem:[%s12 + $0x78] sm:$0xff]
  %v1396 = vld [vmem:[%s12 + $0x80] sm:$0xff]
  %v1397 = vld [vmem:[%s12 + $0x88] sm:$0xf]
  %v1398 = vld [vmem:[%s12 + $0x8c] sm:$0xff]
  %v1399 = vld [vmem:[%s12 + $0x94] sm:$0xff]
  %v1400 = vld [vmem:[%s12 + $0x9c] sm:$0xff]
  %v1401 = vld [vmem:[%s12 + $0xa4] sm:$0xf]
  %v1402 = vld [vmem:[%s12 + $0xa8] sm:$0xff]
  %v1403 = vld [vmem:[%s12 + $0xb0] sm:$0xff]
  %v1404 = vld [vmem:[%s12 + $0xb8] sm:$0xff]
  %v1405 = vld [vmem:[%s12 + $0xc0] sm:$0xf]
  %v1406 = vld [vmem:[%s12 + $0xc4] sm:$0xff]
  %v1407 = vld [vmem:[%s12 + $0xcc] sm:$0xff]
  %v1408 = vld [vmem:[%s12 + $0xd4] sm:$0xff]
  %v1409 = vld [vmem:[%s12 + $0xdc] sm:$0xf]
  %v1410 = vld [vmem:[%s12 + $0xe0] sm:$0xff]
  %v1411 = vld [vmem:[%s12 + $0xe8] sm:$0xff]
  %v1412 = vld [vmem:[%s12 + $0xf0] sm:$0xff]
  %v1413 = vld [vmem:[%s12 + $0xf8] sm:$0xf]
  %v1414 = vld [vmem:[%s12 + $0xfc] sm:$0xff]
  %v1415 = vld [vmem:[%s12 + $0x104] sm:$0xff]
  %v1416 = vld [vmem:[%s12 + $0x10c] sm:$0xff]
  %v1417 = vld [vmem:[%s12 + $0x114] sm:$0xf]
  %v1418 = vld [vmem:[%s12 + $0x118] sm:$0xff]
  %v1419 = vld [vmem:[%s12 + $0x120] sm:$0xff]
  %v1420 = vld [vmem:[%s12 + $0x128] sm:$0xff]
  %v1421 = vld [vmem:[%s12 + $0x130] sm:$0xf]
  %v1422 = vld [vmem:[%s12 + $0x134] sm:$0xff]
  %v1423 = vld [vmem:[%s12 + $0x13c] sm:$0xff]
  %v1424 = vld [vmem:[%s12 + $0x144] sm:$0xff]
  %v1425 = vld [vmem:[%s12 + $0x14c] sm:$0xf]
  %v1426 = vld [vmem:[%s12 + $0x150] sm:$0xff]
  %v1427 = vld [vmem:[%s12 + $0x158] sm:$0xff]
  %v1428 = vld [vmem:[%s12 + $0x160] sm:$0xff]
  %v1429 = vld [vmem:[%s12 + $0x168] sm:$0xf]
  %v1430 = vld [vmem:[%s12 + $0x16c] sm:$0xff]
  %v1431 = vld [vmem:[%s12 + $0x174] sm:$0xff]
  %v1432 = vld [vmem:[%s12 + $0x17c] sm:$0xff]
  %v1433 = vld [vmem:[%s12 + $0x184] sm:$0xf]
  %v1434 = vld [vmem:[%s12 + $0x188] sm:$0xff]
  %v1435 = vld [vmem:[%s12 + $0x190] sm:$0xff]
  %v1436 = vld [vmem:[%s12 + $0x198] sm:$0xff]
  %v1437 = vld [vmem:[%s12 + $0x1a0] sm:$0xf]
  %v1438 = vld [vmem:[%s12 + $0x1a4] sm:$0xff]
  %v1439 = vld [vmem:[%s12 + $0x1ac] sm:$0xff]
  %v1440 = vld [vmem:[%s12 + $0x1b4] sm:$0xff]
  %v1441 = vld [vmem:[%s12 + $0x1bc] sm:$0xf]
  %v1442 = vld [vmem:[%s12 + $0x1c0] sm:$0xff]
  %v1443 = vld [vmem:[%s12 + $0x1c8] sm:$0xff]
  %v1444 = vld [vmem:[%s12 + $0x1d0] sm:$0xff]
  %v1445 = vld [vmem:[%s12 + $0x1d8] sm:$0xf]
  %v1446 = vld [vmem:[%s12 + $0x1dc] sm:$0xff]
  %v1447 = vld [vmem:[%s12 + $0x1e4] sm:$0xff]
  %v1448 = vld [vmem:[%s12 + $0x1ec] sm:$0xff]
  %v1449 = vld [vmem:[%s12 + $0x1f4] sm:$0xf]
  %v1450 = vld [vmem:[%s12 + $0x1f8] sm:$0xff]
  %v1451 = vld [vmem:[%s12 + $0x200] sm:$0xff]
  %v1452 = vld [vmem:[%s12 + $0x208] sm:$0xff]
  %v1453 = vld [vmem:[%s12 + $0x210] sm:$0xf]
  %v1454 = vld [vmem:[%s12 + $0x214] sm:$0xff]
  %v1455 = vld [vmem:[%s12 + $0x21c] sm:$0xff]
  %v1456 = vld [vmem:[%s12 + $0x224] sm:$0xff]
  %v1457 = vld [vmem:[%s12 + $0x22c] sm:$0xf]
  %v1458 = vld [vmem:[%s12 + $0x230] sm:$0xff]
  %v1459 = vld [vmem:[%s12 + $0x238] sm:$0xff]
  %v1460 = vld [vmem:[%s12 + $0x240] sm:$0xff]
  %v1461 = vld [vmem:[%s12 + $0x248] sm:$0xf]
  %v1462 = vld [vmem:[%s12 + $0x24c] sm:$0xff]
  %v1463 = vld [vmem:[%s12 + $0x254] sm:$0xff]
  %v1464 = vld [vmem:[%s12 + $0x25c] sm:$0xff]
  %v1465 = vld [vmem:[%s12 + $0x264] sm:$0xf]
  %v1466 = vld [vmem:[%s12 + $0x268] sm:$0xff]
  %v1467 = vld [vmem:[%s12 + $0x270] sm:$0xff]
  %v1468 = vld [vmem:[%s12 + $0x278] sm:$0xff]
  %v1469 = vld [vmem:[%s12 + $0x280] sm:$0xf]
  %v1470 = vld [vmem:[%s12 + $0x284] sm:$0xff]
  %v1471 = vld [vmem:[%s12 + $0x28c] sm:$0xff]
  %v1472 = vld [vmem:[%s12 + $0x294] sm:$0xff]
  %v1473 = vld [vmem:[%s12 + $0x29c] sm:$0xf]
  %v1474 = vld [vmem:[%s12 + $0x2a0] sm:$0xff]
  %v1475 = vld [vmem:[%s12 + $0x2a8] sm:$0xff]
  %v1476 = vld [vmem:[%s12 + $0x2b0] sm:$0xff]
  %v1477 = vld [vmem:[%s12 + $0x2b8] sm:$0xf]
  %v1478 = vld [vmem:[%s12 + $0x2bc] sm:$0xff]
  %v1479 = vld [vmem:[%s12 + $0x2c4] sm:$0xff]
  %v1480 = vld [vmem:[%s12 + $0x2cc] sm:$0xff]
  %v1481 = vld [vmem:[%s12 + $0x2d4] sm:$0xf]
  %v1482 = vld [vmem:[%s12 + $0x2d8] sm:$0xff]
  %v1483 = vld [vmem:[%s12 + $0x2e0] sm:$0xff]
  %v1484 = vld [vmem:[%s12 + $0x2e8] sm:$0xff]
  %v1485 = vld [vmem:[%s12 + $0x2f0] sm:$0xf]
  %v1486 = vld [vmem:[%s12 + $0x2f4] sm:$0xff]
  %v1487 = vld [vmem:[%s12 + $0x2fc] sm:$0xff]
  %v1488 = vld [vmem:[%s12 + $0x304] sm:$0xff]
  %v1489 = vld [vmem:[%s12 + $0x30c] sm:$0xf]
  %v1490 = vld [vmem:[%s12 + $0x310] sm:$0xff]
  %v1491 = vld [vmem:[%s12 + $0x318] sm:$0xff]
  %v1492 = vld [vmem:[%s12 + $0x320] sm:$0xff]
  %v1493 = vld [vmem:[%s12 + $0x328] sm:$0xf]
  %v1494 = vld [vmem:[%s12 + $0x32c] sm:$0xff]
  %v1495 = vld [vmem:[%s12 + $0x334] sm:$0xff]
  %v1496 = vld [vmem:[%s12 + $0x33c] sm:$0xff]
  %v1497 = vld [vmem:[%s12 + $0x344] sm:$0xf]
  %v1498 = vld [vmem:[%s12 + $0x348] sm:$0xff]
  %v1499 = vld [vmem:[%s12 + $0x350] sm:$0xff]
  %v1500 = vld [vmem:[%s12 + $0x358] sm:$0xff]
  %v1501 = vld [vmem:[%s12 + $0x360] sm:$0xf]
  %v1502 = vld [vmem:[%s12 + $0x364] sm:$0xff]
  %v1503 = vld [vmem:[%s12 + $0x36c] sm:$0xff]
  %v1504 = vld [vmem:[%s12 + $0x374] sm:$0xff]
  %v1505 = vld [vmem:[%s12 + $0x37c] sm:$0xf]
  %v1506 = vld [vmem:[%s13] sm:$0x7f]
  %v1508 = vlaneseq
  %v1509 = vshrl.u32 %v1508, 7
  %v1510 = vsub.s32 0, %v1509
  %v1511 = vrot.slane %v1506, %v1510
  %v1512 = vlaneseq
  %v1513 = vshrl.u32 %v1512, 7
  %v1514 = vsub.s32 1, %v1513
  %v1515 = vrot.slane %v1506, %v1514
  %v1516 = vlaneseq
  %v1517 = vshrl.u32 %v1516, 7
  %v1518 = vsub.s32 2, %v1517
  %v1519 = vrot.slane %v1506, %v1518
  %v1520 = vlaneseq
  %v1521 = vshrl.u32 %v1520, 7
  %v1522 = vsub.s32 3, %v1521
  %v1523 = vrot.slane %v1506, %v1522
  %v1524 = vlaneseq
  %v1525 = vshrl.u32 %v1524, 7
  %v1526 = vsub.s32 4, %v1525
  %v1527 = vrot.slane %v1506, %v1526
  %v1528 = vlaneseq
  %v1529 = vshrl.u32 %v1528, 7
  %v1530 = vsub.s32 5, %v1529
  %v1531 = vrot.slane %v1506, %v1530
  %v1532 = vlaneseq
  %v1533 = vshrl.u32 %v1532, 7
  %v1534 = vsub.s32 6, %v1533
  %v1535 = vrot.slane %v1506, %v1534
  %v1671 = vunpack.c.l.b16 %v1378
  %v1672 = vunpack.c.h.b16 %v1378
  %v1673 = vunpack.c.l.b16 %v1379
  %v1674 = vunpack.c.h.b16 %v1379
  %v1675 = vunpack.c.l.b16 %v1380
  %v1676 = vunpack.c.h.b16 %v1380
  %v1677 = vunpack.c.l.b16 %v1381
  %v1678 = vunpack.c.l.b16 %v1382
  %v1679 = vunpack.c.h.b16 %v1382
  %v1680 = vunpack.c.l.b16 %v1383
  %v1681 = vunpack.c.h.b16 %v1383
  %v1682 = vunpack.c.l.b16 %v1384
  %v1683 = vunpack.c.h.b16 %v1384
  %v1684 = vunpack.c.l.b16 %v1385
  %v1685 = vunpack.c.l.b16 %v1386
  %v1686 = vunpack.c.h.b16 %v1386
  %v1687 = vunpack.c.l.b16 %v1387
  %v1688 = vunpack.c.h.b16 %v1387
  %v1689 = vunpack.c.l.b16 %v1388
  %v1690 = vunpack.c.h.b16 %v1388
  %v1691 = vunpack.c.l.b16 %v1389
  %v1692 = vunpack.c.l.b16 %v1390
  %v1693 = vunpack.c.h.b16 %v1390
  %v1694 = vunpack.c.l.b16 %v1391
  %v1695 = vunpack.c.h.b16 %v1391
  %v1696 = vunpack.c.l.b16 %v1392
  %v1697 = vunpack.c.h.b16 %v1392
  %v1698 = vunpack.c.l.b16 %v1393
  %v1699 = vunpack.c.l.b16 %v1394
  %v1700 = vunpack.c.h.b16 %v1394
  %v1701 = vunpack.c.l.b16 %v1395
  %v1702 = vunpack.c.h.b16 %v1395
  %v1703 = vunpack.c.l.b16 %v1396
  %v1704 = vunpack.c.h.b16 %v1396
  %v1705 = vunpack.c.l.b16 %v1397
  %v1706 = vunpack.c.l.b16 %v1398
  %v1707 = vunpack.c.h.b16 %v1398
  %v1708 = vunpack.c.l.b16 %v1399
  %v1709 = vunpack.c.h.b16 %v1399
  %v1710 = vunpack.c.l.b16 %v1400
  %v1711 = vunpack.c.h.b16 %v1400
  %v1712 = vunpack.c.l.b16 %v1401
  %v1713 = vunpack.c.l.b16 %v1402
  %v1714 = vunpack.c.h.b16 %v1402
  %v1715 = vunpack.c.l.b16 %v1403
  %v1716 = vunpack.c.h.b16 %v1403
  %v1717 = vunpack.c.l.b16 %v1404
  %v1718 = vunpack.c.h.b16 %v1404
  %v1719 = vunpack.c.l.b16 %v1405
  %v1720 = vunpack.c.l.b16 %v1406
  %v1721 = vunpack.c.h.b16 %v1406
  %v1722 = vunpack.c.l.b16 %v1407
  %v1723 = vunpack.c.h.b16 %v1407
  %v1724 = vunpack.c.l.b16 %v1408
  %v1725 = vunpack.c.h.b16 %v1408
  %v1726 = vunpack.c.l.b16 %v1409
  %v1727 = vunpack.c.l.b16 %v1410
  %v1728 = vunpack.c.h.b16 %v1410
  %v1729 = vunpack.c.l.b16 %v1411
  %v1730 = vunpack.c.h.b16 %v1411
  %v1731 = vunpack.c.l.b16 %v1412
  %v1732 = vunpack.c.h.b16 %v1412
  %v1733 = vunpack.c.l.b16 %v1413
  %v1734 = vunpack.c.l.b16 %v1414
  %v1735 = vunpack.c.h.b16 %v1414
  %v1736 = vunpack.c.l.b16 %v1415
  %v1737 = vunpack.c.h.b16 %v1415
  %v1738 = vunpack.c.l.b16 %v1416
  %v1739 = vunpack.c.h.b16 %v1416
  %v1740 = vunpack.c.l.b16 %v1417
  %v1741 = vunpack.c.l.b16 %v1418
  %v1742 = vunpack.c.h.b16 %v1418
  %v1743 = vunpack.c.l.b16 %v1419
  %v1744 = vunpack.c.h.b16 %v1419
  %v1745 = vunpack.c.l.b16 %v1420
  %v1746 = vunpack.c.h.b16 %v1420
  %v1747 = vunpack.c.l.b16 %v1421
  %v1748 = vunpack.c.l.b16 %v1422
  %v1749 = vunpack.c.h.b16 %v1422
  %v1750 = vunpack.c.l.b16 %v1423
  %v1751 = vunpack.c.h.b16 %v1423
  %v1752 = vunpack.c.l.b16 %v1424
  %v1753 = vunpack.c.h.b16 %v1424
  %v1754 = vunpack.c.l.b16 %v1425
  %v1755 = vunpack.c.l.b16 %v1426
  %v1756 = vunpack.c.h.b16 %v1426
  %v1757 = vunpack.c.l.b16 %v1427
  %v1758 = vunpack.c.h.b16 %v1427
  %v1759 = vunpack.c.l.b16 %v1428
  %v1760 = vunpack.c.h.b16 %v1428
  %v1761 = vunpack.c.l.b16 %v1429
  %v1762 = vunpack.c.l.b16 %v1430
  %v1763 = vunpack.c.h.b16 %v1430
  %v1764 = vunpack.c.l.b16 %v1431
  %v1765 = vunpack.c.h.b16 %v1431
  %v1766 = vunpack.c.l.b16 %v1432
  %v1767 = vunpack.c.h.b16 %v1432
  %v1768 = vunpack.c.l.b16 %v1433
  %v1769 = vunpack.c.l.b16 %v1434
  %v1770 = vunpack.c.h.b16 %v1434
  %v1771 = vunpack.c.l.b16 %v1435
  %v1772 = vunpack.c.h.b16 %v1435
  %v1773 = vunpack.c.l.b16 %v1436
  %v1774 = vunpack.c.h.b16 %v1436
  %v1775 = vunpack.c.l.b16 %v1437
  %v1776 = vunpack.c.l.b16 %v1438
  %v1777 = vunpack.c.h.b16 %v1438
  %v1778 = vunpack.c.l.b16 %v1439
  %v1779 = vunpack.c.h.b16 %v1439
  %v1780 = vunpack.c.l.b16 %v1440
  %v1781 = vunpack.c.h.b16 %v1440
  %v1782 = vunpack.c.l.b16 %v1441
  %v1783 = vunpack.c.l.b16 %v1442
  %v1784 = vunpack.c.h.b16 %v1442
  %v1785 = vunpack.c.l.b16 %v1443
  %v1786 = vunpack.c.h.b16 %v1443
  %v1787 = vunpack.c.l.b16 %v1444
  %v1788 = vunpack.c.h.b16 %v1444
  %v1789 = vunpack.c.l.b16 %v1445
  %v1790 = vunpack.c.l.b16 %v1446
  %v1791 = vunpack.c.h.b16 %v1446
  %v1792 = vunpack.c.l.b16 %v1447
  %v1793 = vunpack.c.h.b16 %v1447
  %v1794 = vunpack.c.l.b16 %v1448
  %v1795 = vunpack.c.h.b16 %v1448
  %v1796 = vunpack.c.l.b16 %v1449
  %v1797 = vunpack.c.l.b16 %v1450
  %v1798 = vunpack.c.h.b16 %v1450
  %v1799 = vunpack.c.l.b16 %v1451
  %v1800 = vunpack.c.h.b16 %v1451
  %v1801 = vunpack.c.l.b16 %v1452
  %v1802 = vunpack.c.h.b16 %v1452
  %v1803 = vunpack.c.l.b16 %v1453
  %v1804 = vunpack.c.l.b16 %v1454
  %v1805 = vunpack.c.h.b16 %v1454
  %v1806 = vunpack.c.l.b16 %v1455
  %v1807 = vunpack.c.h.b16 %v1455
  %v1808 = vunpack.c.l.b16 %v1456
  %v1809 = vunpack.c.h.b16 %v1456
  %v1810 = vunpack.c.l.b16 %v1457
  %v1811 = vunpack.c.l.b16 %v1458
  %v1812 = vunpack.c.h.b16 %v1458
  %v1813 = vunpack.c.l.b16 %v1459
  %v1814 = vunpack.c.h.b16 %v1459
  %v1815 = vunpack.c.l.b16 %v1460
  %v1816 = vunpack.c.h.b16 %v1460
  %v1817 = vunpack.c.l.b16 %v1461
  %v1818 = vunpack.c.l.b16 %v1462
  %v1819 = vunpack.c.h.b16 %v1462
  %v1820 = vunpack.c.l.b16 %v1463
  %v1821 = vunpack.c.h.b16 %v1463
  %v1822 = vunpack.c.l.b16 %v1464
  %v1823 = vunpack.c.h.b16 %v1464
  %v1824 = vunpack.c.l.b16 %v1465
  %v1825 = vunpack.c.l.b16 %v1466
  %v1826 = vunpack.c.h.b16 %v1466
  %v1827 = vunpack.c.l.b16 %v1467
  %v1828 = vunpack.c.h.b16 %v1467
  %v1829 = vunpack.c.l.b16 %v1468
  %v1830 = vunpack.c.h.b16 %v1468
  %v1831 = vunpack.c.l.b16 %v1469
  %v1832 = vunpack.c.l.b16 %v1470
  %v1833 = vunpack.c.h.b16 %v1470
  %v1834 = vunpack.c.l.b16 %v1471
  %v1835 = vunpack.c.h.b16 %v1471
  %v1836 = vunpack.c.l.b16 %v1472
  %v1837 = vunpack.c.h.b16 %v1472
  %v1838 = vunpack.c.l.b16 %v1473
  %v1839 = vunpack.c.l.b16 %v1474
  %v1840 = vunpack.c.h.b16 %v1474
  %v1841 = vunpack.c.l.b16 %v1475
  %v1842 = vunpack.c.h.b16 %v1475
  %v1843 = vunpack.c.l.b16 %v1476
  %v1844 = vunpack.c.h.b16 %v1476
  %v1845 = vunpack.c.l.b16 %v1477
  %v1846 = vunpack.c.l.b16 %v1478
  %v1847 = vunpack.c.h.b16 %v1478
  %v1848 = vunpack.c.l.b16 %v1479
  %v1849 = vunpack.c.h.b16 %v1479
  %v1850 = vunpack.c.l.b16 %v1480
  %v1851 = vunpack.c.h.b16 %v1480
  %v1852 = vunpack.c.l.b16 %v1481
  %v1853 = vunpack.c.l.b16 %v1482
  %v1854 = vunpack.c.h.b16 %v1482
  %v1855 = vunpack.c.l.b16 %v1483
  %v1856 = vunpack.c.h.b16 %v1483
  %v1857 = vunpack.c.l.b16 %v1484
  %v1858 = vunpack.c.h.b16 %v1484
  %v1859 = vunpack.c.l.b16 %v1485
  %v1860 = vunpack.c.l.b16 %v1486
  %v1861 = vunpack.c.h.b16 %v1486
  %v1862 = vunpack.c.l.b16 %v1487
  %v1863 = vunpack.c.h.b16 %v1487
  %v1864 = vunpack.c.l.b16 %v1488
  %v1865 = vunpack.c.h.b16 %v1488
  %v1866 = vunpack.c.l.b16 %v1489
  %v1867 = vunpack.c.l.b16 %v1490
  %v1868 = vunpack.c.h.b16 %v1490
  %v1869 = vunpack.c.l.b16 %v1491
  %v1870 = vunpack.c.h.b16 %v1491
  %v1871 = vunpack.c.l.b16 %v1492
  %v1872 = vunpack.c.h.b16 %v1492
  %v1873 = vunpack.c.l.b16 %v1493
  %v1874 = vunpack.c.l.b16 %v1494
  %v1875 = vunpack.c.h.b16 %v1494
  %v1876 = vunpack.c.l.b16 %v1495
  %v1877 = vunpack.c.h.b16 %v1495
  %v1878 = vunpack.c.l.b16 %v1496
  %v1879 = vunpack.c.h.b16 %v1496
  %v1880 = vunpack.c.l.b16 %v1497
  %v1881 = vunpack.c.l.b16 %v1498
  %v1882 = vunpack.c.h.b16 %v1498
  %v1883 = vunpack.c.l.b16 %v1499
  %v1884 = vunpack.c.h.b16 %v1499
  %v1885 = vunpack.c.l.b16 %v1500
  %v1886 = vunpack.c.h.b16 %v1500
  %v1887 = vunpack.c.l.b16 %v1501
  %v1888 = vunpack.c.l.b16 %v1502
  %v1889 = vunpack.c.h.b16 %v1502
  %v1890 = vunpack.c.l.b16 %v1503
  %v1891 = vunpack.c.h.b16 %v1503
  %v1892 = vunpack.c.l.b16 %v1504
  %v1893 = vunpack.c.h.b16 %v1504
  %v1894 = vunpack.c.l.b16 %v1505
  %v1895 = vpack.c.b16 %v1678, %v1671
  %v1896 = vpack.c.b16 %v1679, %v1672
  %v1897 = vpack.c.b16 %v1680, %v1673
  %v1898 = vpack.c.b16 %v1681, %v1674
  %v1899 = vpack.c.b16 %v1682, %v1675
  %v1900 = vpack.c.b16 %v1683, %v1676
  %v1901 = vpack.c.b16 %v1684, %v1677
  %v1902 = vpack.c.b16 %v1692, %v1685
  %v1903 = vpack.c.b16 %v1693, %v1686
  %v1904 = vpack.c.b16 %v1694, %v1687
  %v1905 = vpack.c.b16 %v1695, %v1688
  %v1906 = vpack.c.b16 %v1696, %v1689
  %v1907 = vpack.c.b16 %v1697, %v1690
  %v1908 = vpack.c.b16 %v1698, %v1691
  %v1909 = vpack.c.b16 %v1706, %v1699
  %v1910 = vpack.c.b16 %v1707, %v1700
  %v1911 = vpack.c.b16 %v1708, %v1701
  %v1912 = vpack.c.b16 %v1709, %v1702
  %v1913 = vpack.c.b16 %v1710, %v1703
  %v1914 = vpack.c.b16 %v1711, %v1704
  %v1915 = vpack.c.b16 %v1712, %v1705
  %v1916 = vpack.c.b16 %v1720, %v1713
  %v1917 = vpack.c.b16 %v1721, %v1714
  %v1918 = vpack.c.b16 %v1722, %v1715
  %v1919 = vpack.c.b16 %v1723, %v1716
  %v1920 = vpack.c.b16 %v1724, %v1717
  %v1921 = vpack.c.b16 %v1725, %v1718
  %v1922 = vpack.c.b16 %v1726, %v1719
  %v1923 = vpack.c.b16 %v1734, %v1727
  %v1924 = vpack.c.b16 %v1735, %v1728
  %v1925 = vpack.c.b16 %v1736, %v1729
  %v1926 = vpack.c.b16 %v1737, %v1730
  %v1927 = vpack.c.b16 %v1738, %v1731
  %v1928 = vpack.c.b16 %v1739, %v1732
  %v1929 = vpack.c.b16 %v1740, %v1733
  %v1930 = vpack.c.b16 %v1748, %v1741
  %v1931 = vpack.c.b16 %v1749, %v1742
  %v1932 = vpack.c.b16 %v1750, %v1743
  %v1933 = vpack.c.b16 %v1751, %v1744
  %v1934 = vpack.c.b16 %v1752, %v1745
  %v1935 = vpack.c.b16 %v1753, %v1746
  %v1936 = vpack.c.b16 %v1754, %v1747
  %v1937 = vpack.c.b16 %v1762, %v1755
  %v1938 = vpack.c.b16 %v1763, %v1756
  %v1939 = vpack.c.b16 %v1764, %v1757
  %v1940 = vpack.c.b16 %v1765, %v1758
  %v1941 = vpack.c.b16 %v1766, %v1759
  %v1942 = vpack.c.b16 %v1767, %v1760
  %v1943 = vpack.c.b16 %v1768, %v1761
  %v1944 = vpack.c.b16 %v1776, %v1769
  %v1945 = vpack.c.b16 %v1777, %v1770
  %v1946 = vpack.c.b16 %v1778, %v1771
  %v1947 = vpack.c.b16 %v1779, %v1772
  %v1948 = vpack.c.b16 %v1780, %v1773
  %v1949 = vpack.c.b16 %v1781, %v1774
  %v1950 = vpack.c.b16 %v1782, %v1775
  %v1951 = vpack.c.b16 %v1790, %v1783
  %v1952 = vpack.c.b16 %v1791, %v1784
  %v1953 = vpack.c.b16 %v1792, %v1785
  %v1954 = vpack.c.b16 %v1793, %v1786
  %v1955 = vpack.c.b16 %v1794, %v1787
  %v1956 = vpack.c.b16 %v1795, %v1788
  %v1957 = vpack.c.b16 %v1796, %v1789
  %v1958 = vpack.c.b16 %v1804, %v1797
  %v1959 = vpack.c.b16 %v1805, %v1798
  %v1960 = vpack.c.b16 %v1806, %v1799
  %v1961 = vpack.c.b16 %v1807, %v1800
  %v1962 = vpack.c.b16 %v1808, %v1801
  %v1963 = vpack.c.b16 %v1809, %v1802
  %v1964 = vpack.c.b16 %v1810, %v1803
  %v1965 = vpack.c.b16 %v1818, %v1811
  %v1966 = vpack.c.b16 %v1819, %v1812
  %v1967 = vpack.c.b16 %v1820, %v1813
  %v1968 = vpack.c.b16 %v1821, %v1814
  %v1969 = vpack.c.b16 %v1822, %v1815
  %v1970 = vpack.c.b16 %v1823, %v1816
  %v1971 = vpack.c.b16 %v1824, %v1817
  %v1972 = vpack.c.b16 %v1832, %v1825
  %v1973 = vpack.c.b16 %v1833, %v1826
  %v1974 = vpack.c.b16 %v1834, %v1827
  %v1975 = vpack.c.b16 %v1835, %v1828
  %v1976 = vpack.c.b16 %v1836, %v1829
  %v1977 = vpack.c.b16 %v1837, %v1830
  %v1978 = vpack.c.b16 %v1838, %v1831
  %v1979 = vpack.c.b16 %v1846, %v1839
  %v1980 = vpack.c.b16 %v1847, %v1840
  %v1981 = vpack.c.b16 %v1848, %v1841
  %v1982 = vpack.c.b16 %v1849, %v1842
  %v1983 = vpack.c.b16 %v1850, %v1843
  %v1984 = vpack.c.b16 %v1851, %v1844
  %v1985 = vpack.c.b16 %v1852, %v1845
  %v1986 = vpack.c.b16 %v1860, %v1853
  %v1987 = vpack.c.b16 %v1861, %v1854
  %v1988 = vpack.c.b16 %v1862, %v1855
  %v1989 = vpack.c.b16 %v1863, %v1856
  %v1990 = vpack.c.b16 %v1864, %v1857
  %v1991 = vpack.c.b16 %v1865, %v1858
  %v1992 = vpack.c.b16 %v1866, %v1859
  %v1993 = vpack.c.b16 %v1874, %v1867
  %v1994 = vpack.c.b16 %v1875, %v1868
  %v1995 = vpack.c.b16 %v1876, %v1869
  %v1996 = vpack.c.b16 %v1877, %v1870
  %v1997 = vpack.c.b16 %v1878, %v1871
  %v1998 = vpack.c.b16 %v1879, %v1872
  %v1999 = vpack.c.b16 %v1880, %v1873
  %v2000 = vpack.c.b16 %v1888, %v1881
  %v2001 = vpack.c.b16 %v1889, %v1882
  %v2002 = vpack.c.b16 %v1890, %v1883
  %v2003 = vpack.c.b16 %v1891, %v1884
  %v2004 = vpack.c.b16 %v1892, %v1885
  %v2005 = vpack.c.b16 %v1893, %v1886
  %v2006 = vpack.c.b16 %v1894, %v1887
  %2119 = vmatprep.subr.bf16.mxu0 %v1896
  %2120 = vmatpush1.bf16.msra.mxu0 %v1895
  %2121 = vmatprep.subr.bf16.mxu0 %v1903
  %2122 = vmatpush1.bf16.msra.mxu0 %v1902
  %2123 = vmatprep.subr.bf16.mxu0 %v1910
  %2124 = vmatpush1.bf16.msra.mxu0 %v1909
  %2125 = vmatprep.subr.bf16.mxu0 %v1917
  %2126 = vmatpush1.bf16.msra.mxu0 %v1916
  %2127 = vmatprep.subr.bf16.mxu0 %v1924
  %2128 = vmatpush1.bf16.msra.mxu0 %v1923
  %2129 = vmatprep.subr.bf16.mxu0 %v1931
  %2130 = vmatpush1.bf16.msra.mxu0 %v1930
  %2131 = vmatprep.subr.bf16.mxu0 %v1938
  %2132 = vmatpush1.bf16.msra.mxu0 %v1937
  %2133 = vmatprep.subr.bf16.mxu0 %v1945
  %2134 = vmatpush1.bf16.msra.mxu0 %v1944
  %2135 = vmatprep.subr.bf16.mxu0 %v1952
  %2136 = vmatpush1.bf16.msra.mxu0 %v1951
  %2137 = vmatprep.subr.bf16.mxu0 %v1959
  %2138 = vmatpush1.bf16.msra.mxu0 %v1958
  %2139 = vmatprep.subr.bf16.mxu0 %v1966
  %2140 = vmatpush1.bf16.msra.mxu0 %v1965
  %2141 = vmatprep.subr.bf16.mxu0 %v1973
  %2142 = vmatpush1.bf16.msra.mxu0 %v1972
  %2143 = vmatprep.subr.bf16.mxu0 %v1980
  %2144 = vmatpush1.bf16.msra.mxu0 %v1979
  %2145 = vmatprep.subr.bf16.mxu0 %v1987
  %2146 = vmatpush1.bf16.msra.mxu0 %v1986
  %2147 = vmatprep.subr.bf16.mxu0 %v1994
  %2148 = vmatpush1.bf16.msra.mxu0 %v1993
  %2149 = vmatprep.subr.bf16.mxu0 %v2001
  %2150 = vmatpush1.bf16.msra.mxu0 %v2000
  %2151 = vmatprep.mubr.bf16.mxu0 %v1377
  %2152 = vmatmul.mubr.bf16.gmra.mrb[0].mxu0 %v1376
  %v2153 = vpop.f32.mrb[0].mxu0
  %v2154 = vadd.f32 %v1511, %v2153
  %v2155 = vpop.f32.mrb[0].mxu0
  %v2156 = vadd.f32 %v1515, %v2155
  %v2157 = vpop.f32.mrb[0].mxu0
  %v2158 = vadd.f32 %v1511, %v2157
  %v2159 = vpop.f32.mrb[0].mxu0
  %v2160 = vadd.f32 %v1515, %v2159
  %2161 = vdwg.mxu0
  %2162 = vmatprep.subr.bf16.mxu0 %v1898
  %2163 = vmatpush1.bf16.msra.mxu0 %v1897
  %2164 = vmatprep.subr.bf16.mxu0 %v1905
  %2165 = vmatpush1.bf16.msra.mxu0 %v1904
  %2166 = vmatprep.subr.bf16.mxu0 %v1912
  %2167 = vmatpush1.bf16.msra.mxu0 %v1911
  %2168 = vmatprep.subr.bf16.mxu0 %v1919
  %2169 = vmatpush1.bf16.msra.mxu0 %v1918
  %2170 = vmatprep.subr.bf16.mxu0 %v1926
  %2171 = vmatpush1.bf16.msra.mxu0 %v1925
  %2172 = vmatprep.subr.bf16.mxu0 %v1933
  %2173 = vmatpush1.bf16.msra.mxu0 %v1932
  %2174 = vmatprep.subr.bf16.mxu0 %v1940
  %2175 = vmatpush1.bf16.msra.mxu0 %v1939
  %2176 = vmatprep.subr.bf16.mxu0 %v1947
  %2177 = vmatpush1.bf16.msra.mxu0 %v1946
  %2178 = vmatprep.subr.bf16.mxu0 %v1954
  %2179 = vmatpush1.bf16.msra.mxu0 %v1953
  %2180 = vmatprep.subr.bf16.mxu0 %v1961
  %2181 = vmatpush1.bf16.msra.mxu0 %v1960
  %2182 = vmatprep.subr.bf16.mxu0 %v1968
  %2183 = vmatpush1.bf16.msra.mxu0 %v1967
  %2184 = vmatprep.subr.bf16.mxu0 %v1975
  %2185 = vmatpush1.bf16.msra.mxu0 %v1974
  %2186 = vmatprep.subr.bf16.mxu0 %v1982
  %2187 = vmatpush1.bf16.msra.mxu0 %v1981
  %2188 = vmatprep.subr.bf16.mxu0 %v1989
  %2189 = vmatpush1.bf16.msra.mxu0 %v1988
  %2190 = vmatprep.subr.bf16.mxu0 %v1996
  %2191 = vmatpush1.bf16.msra.mxu0 %v1995
  %2192 = vmatprep.subr.bf16.mxu0 %v2003
  %2193 = vmatpush1.bf16.msra.mxu0 %v2002
  %2194 = vmatprep.mubr.bf16.mxu0 %v1377
  %2195 = vmatmul.mubr.bf16.gmra.mrb[0].mxu0 %v1376
  %v2196 = vpop.f32.mrb[0].mxu0
  %v2197 = vadd.f32 %v1519, %v2196
  %v2198 = vpop.f32.mrb[0].mxu0
  %v2199 = vadd.f32 %v1523, %v2198
  %v2200 = vpop.f32.mrb[0].mxu0
  %v2201 = vadd.f32 %v1519, %v2200
  %v2202 = vpop.f32.mrb[0].mxu0
  %v2203 = vadd.f32 %v1523, %v2202
  %2204 = vdwg.mxu0
  %2205 = vmatprep.subr.bf16.mxu0 %v1900
  %2206 = vmatpush1.bf16.msra.mxu0 %v1899
  %2207 = vmatprep.subr.bf16.mxu0 %v1907
  %2208 = vmatpush1.bf16.msra.mxu0 %v1906
  %2209 = vmatprep.subr.bf16.mxu0 %v1914
  %2210 = vmatpush1.bf16.msra.mxu0 %v1913
  %2211 = vmatprep.subr.bf16.mxu0 %v1921
  %2212 = vmatpush1.bf16.msra.mxu0 %v1920
  %2213 = vmatprep.subr.bf16.mxu0 %v1928
  %2214 = vmatpush1.bf16.msra.mxu0 %v1927
  %2215 = vmatprep.subr.bf16.mxu0 %v1935
  %2216 = vmatpush1.bf16.msra.mxu0 %v1934
  %2217 = vmatprep.subr.bf16.mxu0 %v1942
  %2218 = vmatpush1.bf16.msra.mxu0 %v1941
  %2219 = vmatprep.subr.bf16.mxu0 %v1949
  %2220 = vmatpush1.bf16.msra.mxu0 %v1948
  %2221 = vmatprep.subr.bf16.mxu0 %v1956
  %2222 = vmatpush1.bf16.msra.mxu0 %v1955
  %2223 = vmatprep.subr.bf16.mxu0 %v1963
  %2224 = vmatpush1.bf16.msra.mxu0 %v1962
  %2225 = vmatprep.subr.bf16.mxu0 %v1970
  %2226 = vmatpush1.bf16.msra.mxu0 %v1969
  %2227 = vmatprep.subr.bf16.mxu0 %v1977
  %2228 = vmatpush1.bf16.msra.mxu0 %v1976
  %2229 = vmatprep.subr.bf16.mxu0 %v1984
  %2230 = vmatpush1.bf16.msra.mxu0 %v1983
  %2231 = vmatprep.subr.bf16.mxu0 %v1991
  %2232 = vmatpush1.bf16.msra.mxu0 %v1990
  %2233 = vmatprep.subr.bf16.mxu0 %v1998
  %2234 = vmatpush1.bf16.msra.mxu0 %v1997
  %2235 = vmatprep.subr.bf16.mxu0 %v2005
  %2236 = vmatpush1.bf16.msra.mxu0 %v2004
  %2237 = vmatprep.mubr.bf16.mxu0 %v1377
  %2238 = vmatmul.mubr.bf16.gmra.mrb[0].mxu0 %v1376
  %v2239 = vpop.f32.mrb[0].mxu0
  %v2240 = vadd.f32 %v1527, %v2239
  %v2241 = vpop.f32.mrb[0].mxu0
  %v2242 = vadd.f32 %v1531, %v2241
  %v2243 = vpop.f32.mrb[0].mxu0
  %v2244 = vadd.f32 %v1527, %v2243
  %v2245 = vpop.f32.mrb[0].mxu0
  %v2246 = vadd.f32 %v1531, %v2245
  %2247 = vdwg.mxu0
  %2248 = vmatprep.subr.bf16.mxu0 0
  %2249 = vmatpush1.bf16.msra.mxu0 %v1901
  %2250 = vmatprep.subr.bf16.mxu0 0
  %2251 = vmatpush1.bf16.msra.mxu0 %v1908
  %2252 = vmatprep.subr.bf16.mxu0 0
  %2253 = vmatpush1.bf16.msra.mxu0 %v1915
  %2254 = vmatprep.subr.bf16.mxu0 0
  %2255 = vmatpush1.bf16.msra.mxu0 %v1922
  %2256 = vmatprep.subr.bf16.mxu0 0
  %2257 = vmatpush1.bf16.msra.mxu0 %v1929
  %2258 = vmatprep.subr.bf16.mxu0 0
  %2259 = vmatpush1.bf16.msra.mxu0 %v1936
  %2260 = vmatprep.subr.bf16.mxu0 0
  %2261 = vmatpush1.bf16.msra.mxu0 %v1943
  %2262 = vmatprep.subr.bf16.mxu0 0
  %2263 = vmatpush1.bf16.msra.mxu0 %v1950
  %2264 = vmatprep.subr.bf16.mxu0 0
  %2265 = vmatpush1.bf16.msra.mxu0 %v1957
  %2266 = vmatprep.subr.bf16.mxu0 0
  %2267 = vmatpush1.bf16.msra.mxu0 %v1964
  %2268 = vmatprep.subr.bf16.mxu0 0
  %2269 = vmatpush1.bf16.msra.mxu0 %v1971
  %2270 = vmatprep.subr.bf16.mxu0 0
  %2271 = vmatpush1.bf16.msra.mxu0 %v1978
  %2272 = vmatprep.subr.bf16.mxu0 0
  %2273 = vmatpush1.bf16.msra.mxu0 %v1985
  %2274 = vmatprep.subr.bf16.mxu0 0
  %2275 = vmatpush1.bf16.msra.mxu0 %v1992
  %2276 = vmatprep.subr.bf16.mxu0 0
  %2277 = vmatpush1.bf16.msra.mxu0 %v1999
  %2278 = vmatprep.subr.bf16.mxu0 0
  %2279 = vmatpush1.bf16.msra.mxu0 %v2006
  %2280 = vmatprep.mubr.bf16.mxu0 %v1377
  %2281 = vmatmul.mubr.bf16.gmra.mrb[0].mxu0 %v1376
  %v2282 = vpop.f32.mrb[0].mxu0
  %v2283 = vadd.f32 %v1535, %v2282
  %v2284 = vpop.f32.mrb[0].mxu0
  %v2285 = vpop.f32.mrb[0].mxu0
  %v2286 = vadd.f32 %v1535, %v2285
  %v2287 = vpop.f32.mrb[0].mxu0
  %2288 = vdwg.mxu0
  %v2289 = vand.u32 2147483647, %v2154
  %v2290 = vand.u32 2147483647, %v2156
  %v2291 = vand.u32 2147483647, %v2197
  %v2292 = vand.u32 2147483647, %v2199
  %v2293 = vand.u32 2147483647, %v2240
  %v2294 = vand.u32 2147483647, %v2242
  %v2295 = vand.u32 2147483647, %v2283
  %v2296 = vand.u32 2147483647, %v2158
  %v2297 = vand.u32 2147483647, %v2160
  %v2298 = vand.u32 2147483647, %v2201
  %v2299 = vand.u32 2147483647, %v2203
  %v2300 = vand.u32 2147483647, %v2244
  %v2301 = vand.u32 2147483647, %v2246
  %v2302 = vand.u32 2147483647, %v2286
  %v2303 = vsub.f32 0.0, %v2289
  %v2304 = vsub.f32 0.0, %v2290
  %v2305 = vsub.f32 0.0, %v2291
  %v2306 = vsub.f32 0.0, %v2292
  %v2307 = vsub.f32 0.0, %v2293
  %v2308 = vsub.f32 0.0, %v2294
  %v2309 = vsub.f32 0.0, %v2295
  %v2310 = vsub.f32 0.0, %v2296
  %v2311 = vsub.f32 0.0, %v2297
  %v2312 = vsub.f32 0.0, %v2298
  %v2313 = vsub.f32 0.0, %v2299
  %v2314 = vsub.f32 0.0, %v2300
  %v2315 = vsub.f32 0.0, %v2301
  %v2316 = vsub.f32 0.0, %v2302
  %v2317 = vmul.f32 %v2303, 1.442695
  %v2318 = vpow.pop %v2317
  %v2319 = vmul.f32 %v2304, 1.442695
  %v2320 = vpow.pop %v2319
  %v2321 = vmul.f32 %v2305, 1.442695
  %v2322 = vpow.pop %v2321
  %v2323 = vmul.f32 %v2306, 1.442695
  %v2324 = vpow.pop %v2323
  %v2325 = vmul.f32 %v2307, 1.442695
  %v2326 = vpow.pop %v2325
  %v2327 = vmul.f32 %v2308, 1.442695
  %v2328 = vpow.pop %v2327
  %v2329 = vmul.f32 %v2309, 1.442695
  %v2330 = vpow.pop %v2329
  %v2331 = vmul.f32 %v2310, 1.442695
  %v2332 = vpow.pop %v2331
  %v2333 = vmul.f32 %v2311, 1.442695
  %v2334 = vpow.pop %v2333
  %v2335 = vmul.f32 %v2312, 1.442695
  %v2336 = vpow.pop %v2335
  %v2337 = vmul.f32 %v2313, 1.442695
  %v2338 = vpow.pop %v2337
  %v2339 = vmul.f32 %v2314, 1.442695
  %v2340 = vpow.pop %v2339
  %v2341 = vmul.f32 %v2315, 1.442695
  %v2342 = vpow.pop %v2341
  %v2343 = vmul.f32 %v2316, 1.442695
  %v2344 = vpow.pop %v2343
  %v2345 = vadd.f32 %v2318, 1.0
  %v2346 = vadd.f32 %v2320, 1.0
  %v2347 = vadd.f32 %v2322, 1.0
  %v2348 = vadd.f32 %v2324, 1.0
  %v2349 = vadd.f32 %v2326, 1.0
  %v2350 = vadd.f32 %v2328, 1.0
  %v2351 = vadd.f32 %v2330, 1.0
  %v2352 = vadd.f32 %v2332, 1.0
  %v2353 = vadd.f32 %v2334, 1.0
  %v2354 = vadd.f32 %v2336, 1.0
  %v2355 = vadd.f32 %v2338, 1.0
  %v2356 = vadd.f32 %v2340, 1.0
  %v2357 = vadd.f32 %v2342, 1.0
  %v2358 = vadd.f32 %v2344, 1.0
  %v2359 = vrcp.pop %v2345
  %v2360 = vrcp.pop %v2346
  %v2361 = vrcp.pop %v2347
  %v2362 = vrcp.pop %v2348
  %v2363 = vrcp.pop %v2349
  %v2364 = vrcp.pop %v2350
  %v2365 = vrcp.pop %v2351
  %v2366 = vrcp.pop %v2352
  %v2367 = vrcp.pop %v2353
  %v2368 = vrcp.pop %v2354
  %v2369 = vrcp.pop %v2355
  %v2370 = vrcp.pop %v2356
  %v2371 = vrcp.pop %v2357
  %v2372 = vrcp.pop %v2358
  %vm2373 = vcmp.ge.f32.partialorder %v2154, 0.0
  %vm2374 = vcmp.ge.f32.partialorder %v2156, 0.0
  %vm2375 = vcmp.ge.f32.partialorder %v2197, 0.0
  %vm2376 = vcmp.ge.f32.partialorder %v2199, 0.0
  %vm2377 = vcmp.ge.f32.partialorder %v2240, 0.0
  %vm2378 = vcmp.ge.f32.partialorder %v2242, 0.0
  %vm2379 = vcmp.ge.f32.partialorder %v2283, 0.0
  %vm2380 = vcmp.ge.f32.partialorder %v2158, 0.0
  %vm2381 = vcmp.ge.f32.partialorder %v2160, 0.0
  %vm2382 = vcmp.ge.f32.partialorder %v2201, 0.0
  %vm2383 = vcmp.ge.f32.partialorder %v2203, 0.0
  %vm2384 = vcmp.ge.f32.partialorder %v2244, 0.0
  %vm2385 = vcmp.ge.f32.partialorder %v2246, 0.0
  %vm2386 = vcmp.ge.f32.partialorder %v2286, 0.0
  %v2387 = vmul.f32 %v2318, %v2359
  %v2388 = vmul.f32 %v2320, %v2360
  %v2389 = vmul.f32 %v2322, %v2361
  %v2390 = vmul.f32 %v2324, %v2362
  %v2391 = vmul.f32 %v2326, %v2363
  %v2392 = vmul.f32 %v2328, %v2364
  %v2393 = vmul.f32 %v2330, %v2365
  %v2394 = vmul.f32 %v2332, %v2366
  %v2395 = vmul.f32 %v2334, %v2367
  %v2396 = vmul.f32 %v2336, %v2368
  %v2397 = vmul.f32 %v2338, %v2369
  %v2398 = vmul.f32 %v2340, %v2370
  %v2399 = vmul.f32 %v2342, %v2371
  %v2400 = vmul.f32 %v2344, %v2372
  %v2401 = vsel %vm2373, %v2359, %v2387
  %v2402 = vsel %vm2374, %v2360, %v2388
  %v2403 = vsel %vm2375, %v2361, %v2389
  %v2404 = vsel %vm2376, %v2362, %v2390
  %v2405 = vsel %vm2377, %v2363, %v2391
  %v2406 = vsel %vm2378, %v2364, %v2392
  %v2407 = vsel %vm2379, %v2365, %v2393
  %v2408 = vsel %vm2380, %v2366, %v2394
  %v2409 = vsel %vm2381, %v2367, %v2395
  %v2410 = vsel %vm2382, %v2368, %v2396
  %v2411 = vsel %vm2383, %v2369, %v2397
  %v2412 = vsel %vm2384, %v2370, %v2398
  %v2413 = vsel %vm2385, %v2371, %v2399
  %v2414 = vsel %vm2386, %v2372, %v2400
  %v2415 = vmin.f32 %v2401, 1.0
  %v2416 = vmin.f32 %v2402, 1.0
  %v2417 = vmin.f32 %v2403, 1.0
  %v2418 = vmin.f32 %v2404, 1.0
  %v2419 = vmin.f32 %v2405, 1.0
  %v2420 = vmin.f32 %v2406, 1.0
  %v2421 = vmin.f32 %v2407, 1.0
  %v2422 = vmin.f32 %v2408, 1.0
  %v2423 = vmin.f32 %v2409, 1.0
  %v2424 = vmin.f32 %v2410, 1.0
  %v2425 = vmin.f32 %v2411, 1.0
  %v2426 = vmin.f32 %v2412, 1.0
  %v2427 = vmin.f32 %v2413, 1.0
  %v2428 = vmin.f32 %v2414, 1.0
  %2429 = vst [vmem:[%s14] sm:$0xff] %v2415
  %2430 = vst [vmem:[%s14 + $0x8] sm:$0xff] %v2416
  %2431 = vst [vmem:[%s14 + $0x10] sm:$0xff] %v2417
  %2432 = vst [vmem:[%s14 + $0x18] sm:$0xff] %v2418
  %2433 = vst [vmem:[%s14 + $0x20] sm:$0xff] %v2419
  %2434 = vst [vmem:[%s14 + $0x28] sm:$0xff] %v2420
  %2435 = vst.msk [vmem:[%s14 + $0x30] sm:$0xff] %vm693, %v2421
  %2436 = vst [vmem:[%s14 + $0x38] sm:$0xff] %v2422
  %2437 = vst [vmem:[%s14 + $0x40] sm:$0xff] %v2423
  %2438 = vst [vmem:[%s14 + $0x48] sm:$0xff] %v2424
  %2439 = vst [vmem:[%s14 + $0x50] sm:$0xff] %v2425
  %2440 = vst [vmem:[%s14 + $0x58] sm:$0xff] %v2426
  %2441 = vst [vmem:[%s14 + $0x60] sm:$0xff] %v2427
  %2442 = vst.msk [vmem:[%s14 + $0x68] sm:$0xff] %vm693, %v2428
  %v2443 = vlaneseq
  %v2444 = vand.u32 %v2443, 127
  %v2445 = vlaneseq
  %v2446 = vshrl.u32 %v2445, 7
  %v2447 = vadd.s32 %v2446, 8
  %s2448 = smul.u32 0, 16
  %v2449 = vstv %s2448
  %v2450 = vadd.s32 %v2446, %v2449
  %v2451 = vadd.s32 %v2447, %v2449
  %vm2452 = vcmp.lt.s32.totalorder %v2450, 8
  %vm2453 = vcmp.lt.s32.totalorder %v2451, 8
  %vm2454 = vcmp.lt.s32.totalorder %v2444, 10
  %vm2455 = vcmp.ge.s32.totalorder %v2444, 64
  %vm2456 = vcmp.lt.s32.totalorder %v2444, 74
  %vm2457 = vmand %vm2455, %vm2456
  %v2458 = vmul.f32 %v1138, %v1138
  %v2459 = vmul.f32 %v1139, %v1139
  %vm2460 = vmor %vm2454, %vm2457
  %vm2461 = vmand %vm2452, %vm2460
  %vm2462 = vmand %vm2453, %vm2460
  %v2463 = vsel %vm2461, %v2458, 0.0
  %v2464 = vsel %vm2462, %v2459, 0.0
  %vm2465 = vmand %vm2452, %vm2457
  %vm2466 = vmand %vm2453, %vm2457
  %v2467 = vadd.f32 %v2458, 1e-08
  %v2468 = vadd.f32 %v2459, 1e-08
  %v2469 = vlog2.pop %v2467
  %v2470 = vmul.f32 %v2469, 0.6931472
  %v2471 = vlog2.pop %v2468
  %v2472 = vmul.f32 %v2471, 0.6931472
  %v2473 = vsub.f32 0.0, %v2470
  %v2474 = vsub.f32 0.0, %v2472
  %v2475 = vsub.f32 %v2473, 1.0
  %v2476 = vsub.f32 %v2474, 1.0
  %v2477 = vsel %vm2465, %v2475, 0.0
  %v2478 = vsel %vm2466, %v2476, 0.0
  %v2479 = vadd.f32 %v2463, %v2477
  %v2480 = vadd.f32 %v2464, %v2478
  %v2481 = vadd.f32 %v2479, %v2480
  %v2482 = vrot.slane %v2481, 4
  %v2483 = vadd.f32 %v2481, %v2482
  %v2484 = vrot.slane %v2483, 2
  %v2485 = vadd.f32 %v2483, %v2484
  %v2486 = vrot.slane %v2485, 1
  %v2487 = vadd.f32 %v2485, %v2486
  %2488 = vst [vmem:[%s15] sm:$0x1] %v2487
  // Predicated region
  $region58: #{vae_forward.1} parent=0 // pred_check
    _
  $region59: #{vae_forward.1} parent=0 // pred_check_branch
    %2490 = sbr.rel (0) target = $region61
  $region60: #{vae_forward.1} parent=0 // pred_region
    _
  $region61: #{vae_forward.1} parent=0 // pred_fallthru
    _
  // Predicated region
  $region62: #{vae_forward.1} parent=0 // pred_check
    _
  $region63: #{vae_forward.1} parent=0 // pred_check_branch
    %2492 = sbr.rel (0) target = $region65
  $region64: #{vae_forward.1} parent=0 // pred_region
    _
  $region65: #{vae_forward.1} parent=0 // pred_fallthru
    _
  // Predicated region
  $region66: #{vae_forward.1} parent=0 // pred_check
    _
  $region67: #{vae_forward.1} parent=0 // pred_check_branch
    %2494 = sbr.rel (0) target = $region69
  $region68: #{vae_forward.1} parent=0 // pred_region
    _
  $region69: #{vae_forward.1} parent=0 // pred_fallthru
    _
  // Predicated region
  $region70: #{vae_forward.1} parent=0 // pred_check
    _
  $region71: #{vae_forward.1} parent=0 // pred_check_branch
    %2496 = sbr.rel (0) target = $region73
  $region72: #{vae_forward.1} parent=0 // pred_region
    _
  $region73: #{vae_forward.1} parent=0 // pred_fallthru
    _

</llo_original>
